<compile_context>
chip_gen: v7x
topology: tpu7x:2x2x1
jax: 0.10.0
libtpu: 0.0.40
codegen_flags: <defaults>
</compile_context>

<pallas_src>
import functools

import numpy as np
import jax
import jax.numpy as jnp
from jax import lax
from jax.experimental import pallas as pl
from jax.experimental.pallas import tpu as pltpu


# ------------------------------ fused kernel --------------------------------

def blaze_fused_kernel(xph_ref, mask_ref, dw0_ref, pw0_ref, dwb_ref, pwb_ref,
                       o_ref, *, Ho, Wo, n_blocks):
    # xph_ref : (1, 4, Cin, (Ho+1)*Wp)  even/odd phase slabs of padded input
    # mask_ref: (1, L)                  1.0 on valid flat columns, 0 on halo
    # dw0_ref : (9, Cin, 1)             downsample depthwise weights
    # pw0_ref : (Cout, Cin)             downsample pointwise weights (matmul lhs)
    # dwb_ref : (B, 9, Cout, 1)         residual depthwise weights
    # pwb_ref : (B, Cout, Cout)         residual pointwise weights (matmul lhs)
    # o_ref   : (1, Cout, Hp*Wp)        zero-haloed output slab (VMEM resident)
    Wp = Wo + 2
    Hp = Ho + 2
    L = (Ho - 1) * Wp + Wo            # flat slab length covering all out rows
    Lp = Hp * Wp
    c0 = Wp + 1                        # flat offset of output pixel (0, 0)
    Cin = xph_ref.shape[2]
    Cout = o_ref.shape[1]

    mask = mask_ref[...]               # (1, L)

    # halo of the slab must be zero for the residual 3x3 convs
    o_ref[0] = jnp.zeros((Cout, Lp), jnp.float32)

    # ---- downsample branch a: depthwise 3x3 stride 2 (phase slab taps) ----
    # tap (kh,kw) of flat output position q lives at
    #   phases[(kh%2)*2 + (kw%2)][:, q + (kh//2)*Wp + (kw//2)]
    def ds_tap(kh, kw):
        ph = (kh % 2) * 2 + (kw % 2)
        off = (kh // 2) * Wp + (kw // 2)
        return xph_ref[0, ph, :, off:off + L]            # (Cin, L)

    acc = ds_tap(0, 0) * dw0_ref[0]                       # init from tap 0
    for t in range(1, 9):
        kh, kw = divmod(t, 3)
        acc = acc + ds_tap(kh, kw) * dw0_ref[t]
    # pointwise 1x1 conv on the MXU (bf16 operands, f32 accumulation)
    da = jnp.dot(pw0_ref[...], acc.astype(pw0_ref.dtype),
                 preferred_element_type=jnp.float32)      # (Cout, L)

    # ---- downsample branch b: 2x2 stride-2 max pool ------------------------
    pooled = jnp.maximum(jnp.maximum(ds_tap(1, 1), ds_tap(1, 2)),
                         jnp.maximum(ds_tap(2, 1), ds_tap(2, 2)))  # (Cin, L)

    # ---- add + ReLU; channel padding = split-row stores (no identity matmul)
    if Cin < Cout:
        o_ref[0, 0:Cin, c0:c0 + L] = jnp.maximum(da[0:Cin] + pooled, 0.0) * mask
        o_ref[0, Cin:Cout, c0:c0 + L] = jnp.maximum(da[Cin:Cout], 0.0) * mask
    else:
        o_ref[0, :, c0:c0 + L] = jnp.maximum(da + pooled, 0.0) * mask

    # ---- residual chain, fully VMEM-resident --------------------------------
    for b in range(n_blocks):
        racc = o_ref[0, :, 0:L] * dwb_ref[b, 0]
        for t in range(1, 9):
            kh, kw = divmod(t, 3)
            off = kh * Wp + kw
            racc = racc + o_ref[0, :, off:off + L] * dwb_ref[b, t]
        z = jnp.dot(pwb_ref[b], racc.astype(pwb_ref.dtype),
                    preferred_element_type=jnp.float32)   # (Cout, L)
        y = o_ref[0, :, c0:c0 + L]
        # mask re-zeros the in-row halo columns so the next conv's padding is 0
        o_ref[0, :, c0:c0 + L] = jnp.maximum(y + z, 0.0) * mask


# ------------------------------ wrapper (glue) -------------------------------

def blaze_block(x_nchw, dw0, pw0, dw_blocks, pw_blocks,
                matmul_dtype=jnp.bfloat16):
    """Pallas implementation of BlazeBlock.forward. x_nchw: (N, Cin, H, W)."""
    x = x_nchw.astype(jnp.float32)
    N, Cin, H, W = x.shape
    Cout = pw0.shape[1]
    assert H % 2 == 0 and W % 2 == 0 and Cin <= Cout
    Ho, Wo = H // 2, W // 2
    Hp, Wp = Ho + 2, Wo + 2
    L = (Ho - 1) * Wp + Wo
    Lp = Hp * Wp
    Lph = (Ho + 1) * Wp
    n_blocks = len(dw_blocks)

    # Even/odd phase decomposition of the zero-padded input (same total bytes
    # as x -- no 9x patch blow-up).  Phase width is padded from Wo+1 to Wp so
    # its flattened row stride matches the padded output slab in the kernel.
    xpad = jnp.pad(x, ((0, 0), (0, 0), (1, 1), (1, 1)))        # (N,Cin,H+2,W+2)
    phases = [jnp.pad(xpad[:, :, ph::2, pw_::2],
                      ((0, 0), (0, 0), (0, 0), (0, Wp - (Wo + 1))))
              for ph in range(2) for pw_ in range(2)]
    xph = jnp.stack(phases, axis=1).reshape(N, 4, Cin, Lph)    # (N,4,Cin,Lph)

    # valid-column mask of the flat slab (0 on the 2 halo columns of each row)
    mask = jnp.asarray((np.arange(L) % Wp < Wo).astype(np.float32))[None, :]

    # weights: depthwise as (taps, C, 1) (channel on sublanes, broadcast along
    # lanes); pointwise transposed so the matmul is (Cout,Cin) @ (Cin,L).
    dw0_k = dw0.reshape(9, Cin, 1).astype(jnp.float32)
    pw0_k = pw0.T.astype(matmul_dtype)
    if n_blocks > 0:
        dwb_k = jnp.stack(dw_blocks).reshape(n_blocks, 9, Cout, 1).astype(jnp.float32)
        pwb_k = jnp.stack([p.T for p in pw_blocks]).astype(matmul_dtype)
    else:  # dummy (unused) operands so the kernel signature stays fixed
        dwb_k = jnp.zeros((1, 9, Cout, 1), jnp.float32)
        pwb_k = jnp.zeros((1, Cout, Cout), matmul_dtype)

    kernel = functools.partial(blaze_fused_kernel, Ho=Ho, Wo=Wo,
                               n_blocks=n_blocks)

    out_slab = pl.pallas_call(
        kernel,
        out_shape=jax.ShapeDtypeStruct((N, Cout, Lp), jnp.float32),
        grid=(N,),
        in_specs=[
            pl.BlockSpec((1, 4, Cin, Lph), lambda n: (n, 0, 0, 0)),
            pl.BlockSpec((1, L), lambda n: (0, 0)),
            pl.BlockSpec((9, Cin, 1), lambda n: (0, 0, 0)),
            pl.BlockSpec((Cout, Cin), lambda n: (0, 0)),
            pl.BlockSpec(dwb_k.shape, lambda n: (0, 0, 0, 0)),
            pl.BlockSpec(pwb_k.shape, lambda n: (0, 0, 0)),
        ],
        out_specs=pl.BlockSpec((1, Cout, Lp), lambda n: (n, 0, 0)),
        compiler_params=pltpu.CompilerParams(
            dimension_semantics=("parallel",)),          # 2-TC sharding on v7x
    )(xph, mask, dw0_k, pw0_k, dwb_k, pwb_k)

    # free layout plumbing: (N,Cout,Hp*Wp) -> (N,Cout,Hp,Wp) -> valid center
    return out_slab.reshape(N, Cout, Hp, Wp)[:, :, 1:1 + Ho, 1:1 + Wo]


# ---------------------------- pure-JAX reference -----------------------------

def ref_blaze_block(x_nchw, dw0, pw0, dw_blocks, pw_blocks):
    x = jnp.transpose(x_nchw, (0, 2, 3, 1)).astype(jnp.float32)
    Cin = x.shape[-1]
    Cout = pw0.shape[1]

    def dsconv(xx, dw, pw, stride):
        C = xx.shape[-1]
        y = lax.conv_general_dilated(
            xx, dw.reshape(3, 3, 1, C), (stride, stride), [(1, 1), (1, 1)],
            dimension_numbers=("NHWC", "HWIO", "NHWC"), feature_group_count=C)
        y = lax.conv_general_dilated(
            y, pw.reshape(1, 1, *pw.shape), (1, 1), [(0, 0), (0, 0)],
            dimension_numbers=("NHWC", "HWIO", "NHWC"))
        return y

    da = dsconv(x, dw0, pw0, 2)
    db = lax.reduce_window(x, -jnp.inf, lax.max, (1, 2, 2, 1), (1, 2, 2, 1), "VALID")
    db = jnp.pad(db, ((0, 0), (0, 0), (0, 0), (0, Cout - Cin)))
    y = jax.nn.relu(da + db)
    for dw, pw in zip(dw_blocks, pw_blocks):
        y = jax.nn.relu(y + dsconv(y, dw, pw, 1))
    return jnp.transpose(y, (0, 3, 1, 2))


# ----------------------------------- main ------------------------------------

if __name__ == "__main__":
    N, Cin, Cout, H, W = 2, 4, 8, 16, 16
    block_num = 3

    key = jax.random.PRNGKey(0)
    ks = jax.random.split(key, 3 + 2 * block_num)
    scale = 0.2

    # Parameters: depthwise stored as (9, C) with tap index t = kh*3 + kw;
    # pointwise as (Cin, Cout) -- same external convention as before.
    dw0 = jax.random.normal(ks[0], (9, Cin), jnp.float32) * scale
    pw0 = jax.random.normal(ks[1], (Cin, Cout), jnp.float32) * scale
    dw_blocks = [jax.random.normal(ks[2 + 2 * i], (9, Cout), jnp.float32) * scale
                 for i in range(block_num)]
    pw_blocks = [jax.random.normal(ks[3 + 2 * i], (Cout, Cout), jnp.float32) * scale
                 for i in range(block_num)]
    x = jax.random.normal(ks[-1], (N, Cin, H, W), jnp.float32)

    ref = jax.block_until_ready(ref_blaze_block(x, dw0, pw0, dw_blocks, pw_blocks))

    # strict check with f32 MXU operands
    fwd_f32 = jax.jit(functools.partial(blaze_block, matmul_dtype=jnp.float32))
    out_f32 = jax.block_until_ready(fwd_f32(x, dw0, pw0, dw_blocks, pw_blocks))
    assert out_f32.shape == (N, Cout, H // 2, W // 2), out_f32.shape
    np.testing.assert_allclose(np.asarray(out_f32), np.asarray(ref),
                               rtol=1e-3, atol=1e-3)

    # performance configuration: bf16 MXU operands, f32 accumulation
    # (documented precision change -> looser tolerance vs the f32 reference)
    fwd = jax.jit(blaze_block)
    out = jax.block_until_ready(fwd(x, dw0, pw0, dw_blocks, pw_blocks))
    assert out.shape == (N, Cout, H // 2, W // 2), out.shape
    np.testing.assert_allclose(np.asarray(out), np.asarray(ref),
                               rtol=5e-2, atol=5e-2)

    print("KERNEL_OK")
</pallas_src>

<mosaic_0001>
module attributes {stable_mosaic.version = 11 : i64} {
  func.func @blaze_fused_kernel(%arg0: i32, %arg1: memref<1x4x4x90xf32, #tpu.memory_space<vmem>>, %arg2: memref<1x78xf32, #tpu.memory_space<vmem>>, %arg3: memref<9x4x1xf32, #tpu.memory_space<vmem>>, %arg4: memref<8x4xf32, #tpu.memory_space<vmem>>, %arg5: memref<3x9x8x1xf32, #tpu.memory_space<vmem>>, %arg6: memref<3x8x8xf32, #tpu.memory_space<vmem>>, %arg7: memref<1x8x100xf32, #tpu.memory_space<vmem>>) attributes {dimension_semantics = [#tpu.dimension_semantics<parallel>], iteration_bounds = array<i64: 2>, scalar_prefetch = 0 : i64, scratch_operands = 0 : i64, tpu.core_type = #tpu.core_type<tc>, window_params = [{transform_indices = @transform_0, window_bounds = array<i64: 1, 4, 4, 90>}, {pipeline_mode = #tpu.pipeline_mode<synchronous>, transform_indices = @transform_1, window_bounds = array<i64: 1, 78>}, {pipeline_mode = #tpu.pipeline_mode<synchronous>, transform_indices = @transform_2, window_bounds = array<i64: 9, 4, 1>}, {pipeline_mode = #tpu.pipeline_mode<synchronous>, transform_indices = @transform_3, window_bounds = array<i64: 8, 4>}, {pipeline_mode = #tpu.pipeline_mode<synchronous>, transform_indices = @transform_4, window_bounds = array<i64: 3, 9, 8, 1>}, {pipeline_mode = #tpu.pipeline_mode<synchronous>, transform_indices = @transform_5, window_bounds = array<i64: 3, 8, 8>}, {transform_indices = @transform_6, window_bounds = array<i64: 1, 8, 100>}]} {
    %c0 = arith.constant 0 : index
    %c0_0 = arith.constant 0 : index
    %0 = vector.load %arg2[%c0, %c0_0] : memref<1x78xf32, #tpu.memory_space<vmem>>, vector<1x78xf32>
    %cst = arith.constant 0.000000e+00 : f32
    %1 = vector.broadcast %cst : f32 to vector<8x100xf32>
    %c0_1 = arith.constant 0 : index
    %c0_2 = arith.constant 0 : index
    %c0_3 = arith.constant 0 : index
    %2 = vector.load %arg7[%c0_1, %c0_2, %c0_3] : memref<1x8x100xf32, #tpu.memory_space<vmem>>, vector<1x8x100xf32>
    %3 = vector.shape_cast %2 : vector<1x8x100xf32> to vector<8x100xf32>
    %4 = vector.shape_cast %1 : vector<8x100xf32> to vector<1x8x100xf32>
    tpu.vector_store %arg7[%c0_1, %c0_2, %c0_3], %4 {strides = array<i32>} : memref<1x8x100xf32, #tpu.memory_space<vmem>>, vector<1x8x100xf32>,
    %c0_4 = arith.constant 0 : index
    %c0_5 = arith.constant 0 : index
    %c0_6 = arith.constant 0 : index
    %c0_7 = arith.constant 0 : index
    %5 = vector.load %arg1[%c0_4, %c0_5, %c0_6, %c0_7] : memref<1x4x4x90xf32, #tpu.memory_space<vmem>>, vector<1x1x4x78xf32>
    %6 = vector.shape_cast %5 : vector<1x1x4x78xf32> to vector<4x78xf32>
    %c0_8 = arith.constant 0 : index
    %c0_9 = arith.constant 0 : index
    %c0_10 = arith.constant 0 : index
    %7 = vector.load %arg3[%c0_8, %c0_9, %c0_10] : memref<9x4x1xf32, #tpu.memory_space<vmem>>, vector<1x4x1xf32>
    %8 = vector.shape_cast %7 : vector<1x4x1xf32> to vector<4x1xf32>
    %9 = vector.broadcast %8 : vector<4x1xf32> to vector<4x78xf32>
    %10 = arith.mulf %6, %9 : vector<4x78xf32>
    %c0_11 = arith.constant 0 : index
    %c1 = arith.constant 1 : index
    %c0_12 = arith.constant 0 : index
    %c0_13 = arith.constant 0 : index
    %11 = vector.load %arg1[%c0_11, %c1, %c0_12, %c0_13] : memref<1x4x4x90xf32, #tpu.memory_space<vmem>>, vector<1x1x4x78xf32>
    %12 = vector.shape_cast %11 : vector<1x1x4x78xf32> to vector<4x78xf32>
    %c1_14 = arith.constant 1 : index
    %c0_15 = arith.constant 0 : index
    %c0_16 = arith.constant 0 : index
    %13 = vector.load %arg3[%c1_14, %c0_15, %c0_16] : memref<9x4x1xf32, #tpu.memory_space<vmem>>, vector<1x4x1xf32>
    %14 = vector.shape_cast %13 : vector<1x4x1xf32> to vector<4x1xf32>
    %15 = vector.broadcast %14 : vector<4x1xf32> to vector<4x78xf32>
    %16 = arith.mulf %12, %15 : vector<4x78xf32>
    %17 = arith.addf %10, %16 : vector<4x78xf32>
    %c0_17 = arith.constant 0 : index
    %c0_18 = arith.constant 0 : index
    %c0_19 = arith.constant 0 : index
    %c1_20 = arith.constant 1 : index
    %18 = vector.load %arg1[%c0_17, %c0_18, %c0_19, %c1_20] : memref<1x4x4x90xf32, #tpu.memory_space<vmem>>, vector<1x1x4x78xf32>
    %19 = vector.shape_cast %18 : vector<1x1x4x78xf32> to vector<4x78xf32>
    %c2 = arith.constant 2 : index
    %c0_21 = arith.constant 0 : index
    %c0_22 = arith.constant 0 : index
    %20 = vector.load %arg3[%c2, %c0_21, %c0_22] : memref<9x4x1xf32, #tpu.memory_space<vmem>>, vector<1x4x1xf32>
    %21 = vector.shape_cast %20 : vector<1x4x1xf32> to vector<4x1xf32>
    %22 = vector.broadcast %21 : vector<4x1xf32> to vector<4x78xf32>
    %23 = arith.mulf %19, %22 : vector<4x78xf32>
    %24 = arith.addf %17, %23 : vector<4x78xf32>
    %c0_23 = arith.constant 0 : index
    %c2_24 = arith.constant 2 : index
    %c0_25 = arith.constant 0 : index
    %c0_26 = arith.constant 0 : index
    %25 = vector.load %arg1[%c0_23, %c2_24, %c0_25, %c0_26] : memref<1x4x4x90xf32, #tpu.memory_space<vmem>>, vector<1x1x4x78xf32>
    %26 = vector.shape_cast %25 : vector<1x1x4x78xf32> to vector<4x78xf32>
    %c3 = arith.constant 3 : index
    %c0_27 = arith.constant 0 : index
    %c0_28 = arith.constant 0 : index
    %27 = vector.load %arg3[%c3, %c0_27, %c0_28] : memref<9x4x1xf32, #tpu.memory_space<vmem>>, vector<1x4x1xf32>
    %28 = vector.shape_cast %27 : vector<1x4x1xf32> to vector<4x1xf32>
    %29 = vector.broadcast %28 : vector<4x1xf32> to vector<4x78xf32>
    %30 = arith.mulf %26, %29 : vector<4x78xf32>
    %31 = arith.addf %24, %30 : vector<4x78xf32>
    %c0_29 = arith.constant 0 : index
    %c3_30 = arith.constant 3 : index
    %c0_31 = arith.constant 0 : index
    %c0_32 = arith.constant 0 : index
    %32 = vector.load %arg1[%c0_29, %c3_30, %c0_31, %c0_32] : memref<1x4x4x90xf32, #tpu.memory_space<vmem>>, vector<1x1x4x78xf32>
    %33 = vector.shape_cast %32 : vector<1x1x4x78xf32> to vector<4x78xf32>
    %c4 = arith.constant 4 : index
    %c0_33 = arith.constant 0 : index
    %c0_34 = arith.constant 0 : index
    %34 = vector.load %arg3[%c4, %c0_33, %c0_34] : memref<9x4x1xf32, #tpu.memory_space<vmem>>, vector<1x4x1xf32>
    %35 = vector.shape_cast %34 : vector<1x4x1xf32> to vector<4x1xf32>
    %36 = vector.broadcast %35 : vector<4x1xf32> to vector<4x78xf32>
    %37 = arith.mulf %33, %36 : vector<4x78xf32>
    %38 = arith.addf %31, %37 : vector<4x78xf32>
    %c0_35 = arith.constant 0 : index
    %c2_36 = arith.constant 2 : index
    %c0_37 = arith.constant 0 : index
    %c1_38 = arith.constant 1 : index
    %39 = vector.load %arg1[%c0_35, %c2_36, %c0_37, %c1_38] : memref<1x4x4x90xf32, #tpu.memory_space<vmem>>, vector<1x1x4x78xf32>
    %40 = vector.shape_cast %39 : vector<1x1x4x78xf32> to vector<4x78xf32>
    %c5 = arith.constant 5 : index
    %c0_39 = arith.constant 0 : index
    %c0_40 = arith.constant 0 : index
    %41 = vector.load %arg3[%c5, %c0_39, %c0_40] : memref<9x4x1xf32, #tpu.memory_space<vmem>>, vector<1x4x1xf32>
    %42 = vector.shape_cast %41 : vector<1x4x1xf32> to vector<4x1xf32>
    %43 = vector.broadcast %42 : vector<4x1xf32> to vector<4x78xf32>
    %44 = arith.mulf %40, %43 : vector<4x78xf32>
    %45 = arith.addf %38, %44 : vector<4x78xf32>
    %c0_41 = arith.constant 0 : index
    %c0_42 = arith.constant 0 : index
    %c0_43 = arith.constant 0 : index
    %c10 = arith.constant 10 : index
    %46 = vector.load %arg1[%c0_41, %c0_42, %c0_43, %c10] : memref<1x4x4x90xf32, #tpu.memory_space<vmem>>, vector<1x1x4x78xf32>
    %47 = vector.shape_cast %46 : vector<1x1x4x78xf32> to vector<4x78xf32>
    %c6 = arith.constant 6 : index
    %c0_44 = arith.constant 0 : index
    %c0_45 = arith.constant 0 : index
    %48 = vector.load %arg3[%c6, %c0_44, %c0_45] : memref<9x4x1xf32, #tpu.memory_space<vmem>>, vector<1x4x1xf32>
    %49 = vector.shape_cast %48 : vector<1x4x1xf32> to vector<4x1xf32>
    %50 = vector.broadcast %49 : vector<4x1xf32> to vector<4x78xf32>
    %51 = arith.mulf %47, %50 : vector<4x78xf32>
    %52 = arith.addf %45, %51 : vector<4x78xf32>
    %c0_46 = arith.constant 0 : index
    %c1_47 = arith.constant 1 : index
    %c0_48 = arith.constant 0 : index
    %c10_49 = arith.constant 10 : index
    %53 = vector.load %arg1[%c0_46, %c1_47, %c0_48, %c10_49] : memref<1x4x4x90xf32, #tpu.memory_space<vmem>>, vector<1x1x4x78xf32>
    %54 = vector.shape_cast %53 : vector<1x1x4x78xf32> to vector<4x78xf32>
    %c7 = arith.constant 7 : index
    %c0_50 = arith.constant 0 : index
    %c0_51 = arith.constant 0 : index
    %55 = vector.load %arg3[%c7, %c0_50, %c0_51] : memref<9x4x1xf32, #tpu.memory_space<vmem>>, vector<1x4x1xf32>
    %56 = vector.shape_cast %55 : vector<1x4x1xf32> to vector<4x1xf32>
    %57 = vector.broadcast %56 : vector<4x1xf32> to vector<4x78xf32>
    %58 = arith.mulf %54, %57 : vector<4x78xf32>
    %59 = arith.addf %52, %58 : vector<4x78xf32>
    %c0_52 = arith.constant 0 : index
    %c0_53 = arith.constant 0 : index
    %c0_54 = arith.constant 0 : index
    %c11 = arith.constant 11 : index
    %60 = vector.load %arg1[%c0_52, %c0_53, %c0_54, %c11] : memref<1x4x4x90xf32, #tpu.memory_space<vmem>>, vector<1x1x4x78xf32>
    %61 = vector.shape_cast %60 : vector<1x1x4x78xf32> to vector<4x78xf32>
    %c8 = arith.constant 8 : index
    %c0_55 = arith.constant 0 : index
    %c0_56 = arith.constant 0 : index
    %62 = vector.load %arg3[%c8, %c0_55, %c0_56] : memref<9x4x1xf32, #tpu.memory_space<vmem>>, vector<1x4x1xf32>
    %63 = vector.shape_cast %62 : vector<1x4x1xf32> to vector<4x1xf32>
    %64 = vector.broadcast %63 : vector<4x1xf32> to vector<4x78xf32>
    %65 = arith.mulf %61, %64 : vector<4x78xf32>
    %66 = arith.addf %59, %65 : vector<4x78xf32>
    %c0_57 = arith.constant 0 : index
    %c0_58 = arith.constant 0 : index
    %67 = vector.load %arg4[%c0_57, %c0_58] : memref<8x4xf32, #tpu.memory_space<vmem>>, vector<8x4xf32>
    %cst_59 = arith.constant dense<0.000000e+00> : vector<8x78xf32>
    %68 = tpu.matmul %67, %66, %cst_59 {dimension_numbers = #tpu.dot_dimension_numbers<[1], [0], [0], [1], [0, 0, 1, 1], [], []>} : vector<8x4xf32>, vector<4x78xf32>, vector<8x78xf32> -> vector<8x78xf32>
    %c0_60 = arith.constant 0 : index
    %c3_61 = arith.constant 3 : index
    %c0_62 = arith.constant 0 : index
    %c0_63 = arith.constant 0 : index
    %69 = vector.load %arg1[%c0_60, %c3_61, %c0_62, %c0_63] : memref<1x4x4x90xf32, #tpu.memory_space<vmem>>, vector<1x1x4x78xf32>
    %70 = vector.shape_cast %69 : vector<1x1x4x78xf32> to vector<4x78xf32>
    %c0_64 = arith.constant 0 : index
    %c2_65 = arith.constant 2 : index
    %c0_66 = arith.constant 0 : index
    %c1_67 = arith.constant 1 : index
    %71 = vector.load %arg1[%c0_64, %c2_65, %c0_66, %c1_67] : memref<1x4x4x90xf32, #tpu.memory_space<vmem>>, vector<1x1x4x78xf32>
    %72 = vector.shape_cast %71 : vector<1x1x4x78xf32> to vector<4x78xf32>
    %73 = arith.maximumf %70, %72 : vector<4x78xf32>
    %c0_68 = arith.constant 0 : index
    %c1_69 = arith.constant 1 : index
    %c0_70 = arith.constant 0 : index
    %c10_71 = arith.constant 10 : index
    %74 = vector.load %arg1[%c0_68, %c1_69, %c0_70, %c10_71] : memref<1x4x4x90xf32, #tpu.memory_space<vmem>>, vector<1x1x4x78xf32>
    %75 = vector.shape_cast %74 : vector<1x1x4x78xf32> to vector<4x78xf32>
    %c0_72 = arith.constant 0 : index
    %c0_73 = arith.constant 0 : index
    %c0_74 = arith.constant 0 : index
    %c11_75 = arith.constant 11 : index
    %76 = vector.load %arg1[%c0_72, %c0_73, %c0_74, %c11_75] : memref<1x4x4x90xf32, #tpu.memory_space<vmem>>, vector<1x1x4x78xf32>
    %77 = vector.shape_cast %76 : vector<1x1x4x78xf32> to vector<4x78xf32>
    %78 = arith.maximumf %75, %77 : vector<4x78xf32>
    %79 = arith.maximumf %73, %78 : vector<4x78xf32>
    %80 = vector.extract_strided_slice %68 {offsets = [0, 0], sizes = [4, 78], strides = [1, 1]} : vector<8x78xf32> to vector<4x78xf32>
    %81 = arith.addf %80, %79 : vector<4x78xf32>
    %cst_76 = arith.constant 0.000000e+00 : f32
    %82 = vector.broadcast %cst_76 : f32 to vector<4x78xf32>
    %83 = arith.maximumf %81, %82 : vector<4x78xf32>
    %84 = vector.broadcast %0 : vector<1x78xf32> to vector<4x78xf32>
    %85 = arith.mulf %83, %84 : vector<4x78xf32>
    %c0_77 = arith.constant 0 : index
    %c0_78 = arith.constant 0 : index
    %c11_79 = arith.constant 11 : index
    %86 = vector.load %arg7[%c0_77, %c0_78, %c11_79] : memref<1x8x100xf32, #tpu.memory_space<vmem>>, vector<1x4x78xf32>
    %87 = vector.shape_cast %86 : vector<1x4x78xf32> to vector<4x78xf32>
    %88 = vector.shape_cast %85 : vector<4x78xf32> to vector<1x4x78xf32>
    tpu.vector_store %arg7[%c0_77, %c0_78, %c11_79], %88 {strides = array<i32>} : memref<1x8x100xf32, #tpu.memory_space<vmem>>, vector<1x4x78xf32>,
    %89 = vector.extract_strided_slice %68 {offsets = [4, 0], sizes = [4, 78], strides = [1, 1]} : vector<8x78xf32> to vector<4x78xf32>
    %cst_80 = arith.constant 0.000000e+00 : f32
    %90 = vector.broadcast %cst_80 : f32 to vector<4x78xf32>
    %91 = arith.maximumf %89, %90 : vector<4x78xf32>
    %92 = vector.broadcast %0 : vector<1x78xf32> to vector<4x78xf32>
    %93 = arith.mulf %91, %92 : vector<4x78xf32>
    %c0_81 = arith.constant 0 : index
    %c4_82 = arith.constant 4 : index
    %c11_83 = arith.constant 11 : index
    %94 = vector.load %arg7[%c0_81, %c4_82, %c11_83] : memref<1x8x100xf32, #tpu.memory_space<vmem>>, vector<1x4x78xf32>
    %95 = vector.shape_cast %94 : vector<1x4x78xf32> to vector<4x78xf32>
    %96 = vector.shape_cast %93 : vector<4x78xf32> to vector<1x4x78xf32>
    tpu.vector_store %arg7[%c0_81, %c4_82, %c11_83], %96 {strides = array<i32>} : memref<1x8x100xf32, #tpu.memory_space<vmem>>, vector<1x4x78xf32>,
    %c0_84 = arith.constant 0 : index
    %c0_85 = arith.constant 0 : index
    %c0_86 = arith.constant 0 : index
    %97 = vector.load %arg7[%c0_84, %c0_85, %c0_86] : memref<1x8x100xf32, #tpu.memory_space<vmem>>, vector<1x8x78xf32>
    %98 = vector.shape_cast %97 : vector<1x8x78xf32> to vector<8x78xf32>
    %c0_87 = arith.constant 0 : index
    %c0_88 = arith.constant 0 : index
    %c0_89 = arith.constant 0 : index
    %c0_90 = arith.constant 0 : index
    %99 = vector.load %arg5[%c0_87, %c0_88, %c0_89, %c0_90] : memref<3x9x8x1xf32, #tpu.memory_space<vmem>>, vector<1x1x8x1xf32>
    %100 = vector.shape_cast %99 : vector<1x1x8x1xf32> to vector<8x1xf32>
    %101 = vector.broadcast %100 : vector<8x1xf32> to vector<8x78xf32>
    %102 = arith.mulf %98, %101 : vector<8x78xf32>
    %c0_91 = arith.constant 0 : index
    %c0_92 = arith.constant 0 : index
    %c1_93 = arith.constant 1 : index
    %103 = vector.load %arg7[%c0_91, %c0_92, %c1_93] : memref<1x8x100xf32, #tpu.memory_space<vmem>>, vector<1x8x78xf32>
    %104 = vector.shape_cast %103 : vector<1x8x78xf32> to vector<8x78xf32>
    %c0_94 = arith.constant 0 : index
    %c1_95 = arith.constant 1 : index
    %c0_96 = arith.constant 0 : index
    %c0_97 = arith.constant 0 : index
    %105 = vector.load %arg5[%c0_94, %c1_95, %c0_96, %c0_97] : memref<3x9x8x1xf32, #tpu.memory_space<vmem>>, vector<1x1x8x1xf32>
    %106 = vector.shape_cast %105 : vector<1x1x8x1xf32> to vector<8x1xf32>
    %107 = vector.broadcast %106 : vector<8x1xf32> to vector<8x78xf32>
    %108 = arith.mulf %104, %107 : vector<8x78xf32>
    %109 = arith.addf %102, %108 : vector<8x78xf32>
    %c0_98 = arith.constant 0 : index
    %c0_99 = arith.constant 0 : index
    %c2_100 = arith.constant 2 : index
    %110 = vector.load %arg7[%c0_98, %c0_99, %c2_100] : memref<1x8x100xf32, #tpu.memory_space<vmem>>, vector<1x8x78xf32>
    %111 = vector.shape_cast %110 : vector<1x8x78xf32> to vector<8x78xf32>
    %c0_101 = arith.constant 0 : index
    %c2_102 = arith.constant 2 : index
    %c0_103 = arith.constant 0 : index
    %c0_104 = arith.constant 0 : index
    %112 = vector.load %arg5[%c0_101, %c2_102, %c0_103, %c0_104] : memref<3x9x8x1xf32, #tpu.memory_space<vmem>>, vector<1x1x8x1xf32>
    %113 = vector.shape_cast %112 : vector<1x1x8x1xf32> to vector<8x1xf32>
    %114 = vector.broadcast %113 : vector<8x1xf32> to vector<8x78xf32>
    %115 = arith.mulf %111, %114 : vector<8x78xf32>
    %116 = arith.addf %109, %115 : vector<8x78xf32>
    %c0_105 = arith.constant 0 : index
    %c0_106 = arith.constant 0 : index
    %c10_107 = arith.constant 10 : index
    %117 = vector.load %arg7[%c0_105, %c0_106, %c10_107] : memref<1x8x100xf32, #tpu.memory_space<vmem>>, vector<1x8x78xf32>
    %118 = vector.shape_cast %117 : vector<1x8x78xf32> to vector<8x78xf32>
    %c0_108 = arith.constant 0 : index
    %c3_109 = arith.constant 3 : index
    %c0_110 = arith.constant 0 : index
    %c0_111 = arith.constant 0 : index
    %119 = vector.load %arg5[%c0_108, %c3_109, %c0_110, %c0_111] : memref<3x9x8x1xf32, #tpu.memory_space<vmem>>, vector<1x1x8x1xf32>
    %120 = vector.shape_cast %119 : vector<1x1x8x1xf32> to vector<8x1xf32>
    %121 = vector.broadcast %120 : vector<8x1xf32> to vector<8x78xf32>
    %122 = arith.mulf %118, %121 : vector<8x78xf32>
    %123 = arith.addf %116, %122 : vector<8x78xf32>
    %c0_112 = arith.constant 0 : index
    %c0_113 = arith.constant 0 : index
    %c11_114 = arith.constant 11 : index
    %124 = vector.load %arg7[%c0_112, %c0_113, %c11_114] : memref<1x8x100xf32, #tpu.memory_space<vmem>>, vector<1x8x78xf32>
    %125 = vector.shape_cast %124 : vector<1x8x78xf32> to vector<8x78xf32>
    %c0_115 = arith.constant 0 : index
    %c4_116 = arith.constant 4 : index
    %c0_117 = arith.constant 0 : index
    %c0_118 = arith.constant 0 : index
    %126 = vector.load %arg5[%c0_115, %c4_116, %c0_117, %c0_118] : memref<3x9x8x1xf32, #tpu.memory_space<vmem>>, vector<1x1x8x1xf32>
    %127 = vector.shape_cast %126 : vector<1x1x8x1xf32> to vector<8x1xf32>
    %128 = vector.broadcast %127 : vector<8x1xf32> to vector<8x78xf32>
    %129 = arith.mulf %125, %128 : vector<8x78xf32>
    %130 = arith.addf %123, %129 : vector<8x78xf32>
    %c0_119 = arith.constant 0 : index
    %c0_120 = arith.constant 0 : index
    %c12 = arith.constant 12 : index
    %131 = vector.load %arg7[%c0_119, %c0_120, %c12] : memref<1x8x100xf32, #tpu.memory_space<vmem>>, vector<1x8x78xf32>
    %132 = vector.shape_cast %131 : vector<1x8x78xf32> to vector<8x78xf32>
    %c0_121 = arith.constant 0 : index
    %c5_122 = arith.constant 5 : index
    %c0_123 = arith.constant 0 : index
    %c0_124 = arith.constant 0 : index
    %133 = vector.load %arg5[%c0_121, %c5_122, %c0_123, %c0_124] : memref<3x9x8x1xf32, #tpu.memory_space<vmem>>, vector<1x1x8x1xf32>
    %134 = vector.shape_cast %133 : vector<1x1x8x1xf32> to vector<8x1xf32>
    %135 = vector.broadcast %134 : vector<8x1xf32> to vector<8x78xf32>
    %136 = arith.mulf %132, %135 : vector<8x78xf32>
    %137 = arith.addf %130, %136 : vector<8x78xf32>
    %c0_125 = arith.constant 0 : index
    %c0_126 = arith.constant 0 : index
    %c20 = arith.constant 20 : index
    %138 = vector.load %arg7[%c0_125, %c0_126, %c20] : memref<1x8x100xf32, #tpu.memory_space<vmem>>, vector<1x8x78xf32>
    %139 = vector.shape_cast %138 : vector<1x8x78xf32> to vector<8x78xf32>
    %c0_127 = arith.constant 0 : index
    %c6_128 = arith.constant 6 : index
    %c0_129 = arith.constant 0 : index
    %c0_130 = arith.constant 0 : index
    %140 = vector.load %arg5[%c0_127, %c6_128, %c0_129, %c0_130] : memref<3x9x8x1xf32, #tpu.memory_space<vmem>>, vector<1x1x8x1xf32>
    %141 = vector.shape_cast %140 : vector<1x1x8x1xf32> to vector<8x1xf32>
    %142 = vector.broadcast %141 : vector<8x1xf32> to vector<8x78xf32>
    %143 = arith.mulf %139, %142 : vector<8x78xf32>
    %144 = arith.addf %137, %143 : vector<8x78xf32>
    %c0_131 = arith.constant 0 : index
    %c0_132 = arith.constant 0 : index
    %c21 = arith.constant 21 : index
    %145 = vector.load %arg7[%c0_131, %c0_132, %c21] : memref<1x8x100xf32, #tpu.memory_space<vmem>>, vector<1x8x78xf32>
    %146 = vector.shape_cast %145 : vector<1x8x78xf32> to vector<8x78xf32>
    %c0_133 = arith.constant 0 : index
    %c7_134 = arith.constant 7 : index
    %c0_135 = arith.constant 0 : index
    %c0_136 = arith.constant 0 : index
    %147 = vector.load %arg5[%c0_133, %c7_134, %c0_135, %c0_136] : memref<3x9x8x1xf32, #tpu.memory_space<vmem>>, vector<1x1x8x1xf32>
    %148 = vector.shape_cast %147 : vector<1x1x8x1xf32> to vector<8x1xf32>
    %149 = vector.broadcast %148 : vector<8x1xf32> to vector<8x78xf32>
    %150 = arith.mulf %146, %149 : vector<8x78xf32>
    %151 = arith.addf %144, %150 : vector<8x78xf32>
    %c0_137 = arith.constant 0 : index
    %c0_138 = arith.constant 0 : index
    %c22 = arith.constant 22 : index
    %152 = vector.load %arg7[%c0_137, %c0_138, %c22] : memref<1x8x100xf32, #tpu.memory_space<vmem>>, vector<1x8x78xf32>
    %153 = vector.shape_cast %152 : vector<1x8x78xf32> to vector<8x78xf32>
    %c0_139 = arith.constant 0 : index
    %c8_140 = arith.constant 8 : index
    %c0_141 = arith.constant 0 : index
    %c0_142 = arith.constant 0 : index
    %154 = vector.load %arg5[%c0_139, %c8_140, %c0_141, %c0_142] : memref<3x9x8x1xf32, #tpu.memory_space<vmem>>, vector<1x1x8x1xf32>
    %155 = vector.shape_cast %154 : vector<1x1x8x1xf32> to vector<8x1xf32>
    %156 = vector.broadcast %155 : vector<8x1xf32> to vector<8x78xf32>
    %157 = arith.mulf %153, %156 : vector<8x78xf32>
    %158 = arith.addf %151, %157 : vector<8x78xf32>
    %c0_143 = arith.constant 0 : index
    %c0_144 = arith.constant 0 : index
    %c0_145 = arith.constant 0 : index
    %159 = vector.load %arg6[%c0_143, %c0_144, %c0_145] : memref<3x8x8xf32, #tpu.memory_space<vmem>>, vector<1x8x8xf32>
    %160 = vector.shape_cast %159 : vector<1x8x8xf32> to vector<8x8xf32>
    %cst_146 = arith.constant dense<0.000000e+00> : vector<8x78xf32>
    %161 = tpu.matmul %160, %158, %cst_146 {dimension_numbers = #tpu.dot_dimension_numbers<[1], [0], [0], [1], [0, 0, 1, 1], [], []>} : vector<8x8xf32>, vector<8x78xf32>, vector<8x78xf32> -> vector<8x78xf32>
    %c0_147 = arith.constant 0 : index
    %c0_148 = arith.constant 0 : index
    %c11_149 = arith.constant 11 : index
    %162 = vector.load %arg7[%c0_147, %c0_148, %c11_149] : memref<1x8x100xf32, #tpu.memory_space<vmem>>, vector<1x8x78xf32>
    %163 = vector.shape_cast %162 : vector<1x8x78xf32> to vector<8x78xf32>
    %164 = arith.addf %163, %161 : vector<8x78xf32>
    %cst_150 = arith.constant 0.000000e+00 : f32
    %165 = vector.broadcast %cst_150 : f32 to vector<8x78xf32>
    %166 = arith.maximumf %164, %165 : vector<8x78xf32>
    %167 = vector.broadcast %0 : vector<1x78xf32> to vector<8x78xf32>
    %168 = arith.mulf %166, %167 : vector<8x78xf32>
    %c0_151 = arith.constant 0 : index
    %c0_152 = arith.constant 0 : index
    %c11_153 = arith.constant 11 : index
    %169 = vector.load %arg7[%c0_151, %c0_152, %c11_153] : memref<1x8x100xf32, #tpu.memory_space<vmem>>, vector<1x8x78xf32>
    %170 = vector.shape_cast %169 : vector<1x8x78xf32> to vector<8x78xf32>
    %171 = vector.shape_cast %168 : vector<8x78xf32> to vector<1x8x78xf32>
    tpu.vector_store %arg7[%c0_151, %c0_152, %c11_153], %171 {strides = array<i32>} : memref<1x8x100xf32, #tpu.memory_space<vmem>>, vector<1x8x78xf32>,
    %c0_154 = arith.constant 0 : index
    %c0_155 = arith.constant 0 : index
    %c0_156 = arith.constant 0 : index
    %172 = vector.load %arg7[%c0_154, %c0_155, %c0_156] : memref<1x8x100xf32, #tpu.memory_space<vmem>>, vector<1x8x78xf32>
    %173 = vector.shape_cast %172 : vector<1x8x78xf32> to vector<8x78xf32>
    %c1_157 = arith.constant 1 : index
    %c0_158 = arith.constant 0 : index
    %c0_159 = arith.constant 0 : index
    %c0_160 = arith.constant 0 : index
    %174 = vector.load %arg5[%c1_157, %c0_158, %c0_159, %c0_160] : memref<3x9x8x1xf32, #tpu.memory_space<vmem>>, vector<1x1x8x1xf32>
    %175 = vector.shape_cast %174 : vector<1x1x8x1xf32> to vector<8x1xf32>
    %176 = vector.broadcast %175 : vector<8x1xf32> to vector<8x78xf32>
    %177 = arith.mulf %173, %176 : vector<8x78xf32>
    %c0_161 = arith.constant 0 : index
    %c0_162 = arith.constant 0 : index
    %c1_163 = arith.constant 1 : index
    %178 = vector.load %arg7[%c0_161, %c0_162, %c1_163] : memref<1x8x100xf32, #tpu.memory_space<vmem>>, vector<1x8x78xf32>
    %179 = vector.shape_cast %178 : vector<1x8x78xf32> to vector<8x78xf32>
    %c1_164 = arith.constant 1 : index
    %c1_165 = arith.constant 1 : index
    %c0_166 = arith.constant 0 : index
    %c0_167 = arith.constant 0 : index
    %180 = vector.load %arg5[%c1_164, %c1_165, %c0_166, %c0_167] : memref<3x9x8x1xf32, #tpu.memory_space<vmem>>, vector<1x1x8x1xf32>
    %181 = vector.shape_cast %180 : vector<1x1x8x1xf32> to vector<8x1xf32>
    %182 = vector.broadcast %181 : vector<8x1xf32> to vector<8x78xf32>
    %183 = arith.mulf %179, %182 : vector<8x78xf32>
    %184 = arith.addf %177, %183 : vector<8x78xf32>
    %c0_168 = arith.constant 0 : index
    %c0_169 = arith.constant 0 : index
    %c2_170 = arith.constant 2 : index
    %185 = vector.load %arg7[%c0_168, %c0_169, %c2_170] : memref<1x8x100xf32, #tpu.memory_space<vmem>>, vector<1x8x78xf32>
    %186 = vector.shape_cast %185 : vector<1x8x78xf32> to vector<8x78xf32>
    %c1_171 = arith.constant 1 : index
    %c2_172 = arith.constant 2 : index
    %c0_173 = arith.constant 0 : index
    %c0_174 = arith.constant 0 : index
    %187 = vector.load %arg5[%c1_171, %c2_172, %c0_173, %c0_174] : memref<3x9x8x1xf32, #tpu.memory_space<vmem>>, vector<1x1x8x1xf32>
    %188 = vector.shape_cast %187 : vector<1x1x8x1xf32> to vector<8x1xf32>
    %189 = vector.broadcast %188 : vector<8x1xf32> to vector<8x78xf32>
    %190 = arith.mulf %186, %189 : vector<8x78xf32>
    %191 = arith.addf %184, %190 : vector<8x78xf32>
    %c0_175 = arith.constant 0 : index
    %c0_176 = arith.constant 0 : index
    %c10_177 = arith.constant 10 : index
    %192 = vector.load %arg7[%c0_175, %c0_176, %c10_177] : memref<1x8x100xf32, #tpu.memory_space<vmem>>, vector<1x8x78xf32>
    %193 = vector.shape_cast %192 : vector<1x8x78xf32> to vector<8x78xf32>
    %c1_178 = arith.constant 1 : index
    %c3_179 = arith.constant 3 : index
    %c0_180 = arith.constant 0 : index
    %c0_181 = arith.constant 0 : index
    %194 = vector.load %arg5[%c1_178, %c3_179, %c0_180, %c0_181] : memref<3x9x8x1xf32, #tpu.memory_space<vmem>>, vector<1x1x8x1xf32>
    %195 = vector.shape_cast %194 : vector<1x1x8x1xf32> to vector<8x1xf32>
    %196 = vector.broadcast %195 : vector<8x1xf32> to vector<8x78xf32>
    %197 = arith.mulf %193, %196 : vector<8x78xf32>
    %198 = arith.addf %191, %197 : vector<8x78xf32>
    %c0_182 = arith.constant 0 : index
    %c0_183 = arith.constant 0 : index
    %c11_184 = arith.constant 11 : index
    %199 = vector.load %arg7[%c0_182, %c0_183, %c11_184] : memref<1x8x100xf32, #tpu.memory_space<vmem>>, vector<1x8x78xf32>
    %200 = vector.shape_cast %199 : vector<1x8x78xf32> to vector<8x78xf32>
    %c1_185 = arith.constant 1 : index
    %c4_186 = arith.constant 4 : index
    %c0_187 = arith.constant 0 : index
    %c0_188 = arith.constant 0 : index
    %201 = vector.load %arg5[%c1_185, %c4_186, %c0_187, %c0_188] : memref<3x9x8x1xf32, #tpu.memory_space<vmem>>, vector<1x1x8x1xf32>
    %202 = vector.shape_cast %201 : vector<1x1x8x1xf32> to vector<8x1xf32>
    %203 = vector.broadcast %202 : vector<8x1xf32> to vector<8x78xf32>
    %204 = arith.mulf %200, %203 : vector<8x78xf32>
    %205 = arith.addf %198, %204 : vector<8x78xf32>
    %c0_189 = arith.constant 0 : index
    %c0_190 = arith.constant 0 : index
    %c12_191 = arith.constant 12 : index
    %206 = vector.load %arg7[%c0_189, %c0_190, %c12_191] : memref<1x8x100xf32, #tpu.memory_space<vmem>>, vector<1x8x78xf32>
    %207 = vector.shape_cast %206 : vector<1x8x78xf32> to vector<8x78xf32>
    %c1_192 = arith.constant 1 : index
    %c5_193 = arith.constant 5 : index
    %c0_194 = arith.constant 0 : index
    %c0_195 = arith.constant 0 : index
    %208 = vector.load %arg5[%c1_192, %c5_193, %c0_194, %c0_195] : memref<3x9x8x1xf32, #tpu.memory_space<vmem>>, vector<1x1x8x1xf32>
    %209 = vector.shape_cast %208 : vector<1x1x8x1xf32> to vector<8x1xf32>
    %210 = vector.broadcast %209 : vector<8x1xf32> to vector<8x78xf32>
    %211 = arith.mulf %207, %210 : vector<8x78xf32>
    %212 = arith.addf %205, %211 : vector<8x78xf32>
    %c0_196 = arith.constant 0 : index
    %c0_197 = arith.constant 0 : index
    %c20_198 = arith.constant 20 : index
    %213 = vector.load %arg7[%c0_196, %c0_197, %c20_198] : memref<1x8x100xf32, #tpu.memory_space<vmem>>, vector<1x8x78xf32>
    %214 = vector.shape_cast %213 : vector<1x8x78xf32> to vector<8x78xf32>
    %c1_199 = arith.constant 1 : index
    %c6_200 = arith.constant 6 : index
    %c0_201 = arith.constant 0 : index
    %c0_202 = arith.constant 0 : index
    %215 = vector.load %arg5[%c1_199, %c6_200, %c0_201, %c0_202] : memref<3x9x8x1xf32, #tpu.memory_space<vmem>>, vector<1x1x8x1xf32>
    %216 = vector.shape_cast %215 : vector<1x1x8x1xf32> to vector<8x1xf32>
    %217 = vector.broadcast %216 : vector<8x1xf32> to vector<8x78xf32>
    %218 = arith.mulf %214, %217 : vector<8x78xf32>
    %219 = arith.addf %212, %218 : vector<8x78xf32>
    %c0_203 = arith.constant 0 : index
    %c0_204 = arith.constant 0 : index
    %c21_205 = arith.constant 21 : index
    %220 = vector.load %arg7[%c0_203, %c0_204, %c21_205] : memref<1x8x100xf32, #tpu.memory_space<vmem>>, vector<1x8x78xf32>
    %221 = vector.shape_cast %220 : vector<1x8x78xf32> to vector<8x78xf32>
    %c1_206 = arith.constant 1 : index
    %c7_207 = arith.constant 7 : index
    %c0_208 = arith.constant 0 : index
    %c0_209 = arith.constant 0 : index
    %222 = vector.load %arg5[%c1_206, %c7_207, %c0_208, %c0_209] : memref<3x9x8x1xf32, #tpu.memory_space<vmem>>, vector<1x1x8x1xf32>
    %223 = vector.shape_cast %222 : vector<1x1x8x1xf32> to vector<8x1xf32>
    %224 = vector.broadcast %223 : vector<8x1xf32> to vector<8x78xf32>
    %225 = arith.mulf %221, %224 : vector<8x78xf32>
    %226 = arith.addf %219, %225 : vector<8x78xf32>
    %c0_210 = arith.constant 0 : index
    %c0_211 = arith.constant 0 : index
    %c22_212 = arith.constant 22 : index
    %227 = vector.load %arg7[%c0_210, %c0_211, %c22_212] : memref<1x8x100xf32, #tpu.memory_space<vmem>>, vector<1x8x78xf32>
    %228 = vector.shape_cast %227 : vector<1x8x78xf32> to vector<8x78xf32>
    %c1_213 = arith.constant 1 : index
    %c8_214 = arith.constant 8 : index
    %c0_215 = arith.constant 0 : index
    %c0_216 = arith.constant 0 : index
    %229 = vector.load %arg5[%c1_213, %c8_214, %c0_215, %c0_216] : memref<3x9x8x1xf32, #tpu.memory_space<vmem>>, vector<1x1x8x1xf32>
    %230 = vector.shape_cast %229 : vector<1x1x8x1xf32> to vector<8x1xf32>
    %231 = vector.broadcast %230 : vector<8x1xf32> to vector<8x78xf32>
    %232 = arith.mulf %228, %231 : vector<8x78xf32>
    %233 = arith.addf %226, %232 : vector<8x78xf32>
    %c1_217 = arith.constant 1 : index
    %c0_218 = arith.constant 0 : index
    %c0_219 = arith.constant 0 : index
    %234 = vector.load %arg6[%c1_217, %c0_218, %c0_219] : memref<3x8x8xf32, #tpu.memory_space<vmem>>, vector<1x8x8xf32>
    %235 = vector.shape_cast %234 : vector<1x8x8xf32> to vector<8x8xf32>
    %cst_220 = arith.constant dense<0.000000e+00> : vector<8x78xf32>
    %236 = tpu.matmul %235, %233, %cst_220 {dimension_numbers = #tpu.dot_dimension_numbers<[1], [0], [0], [1], [0, 0, 1, 1], [], []>} : vector<8x8xf32>, vector<8x78xf32>, vector<8x78xf32> -> vector<8x78xf32>
    %c0_221 = arith.constant 0 : index
    %c0_222 = arith.constant 0 : index
    %c11_223 = arith.constant 11 : index
    %237 = vector.load %arg7[%c0_221, %c0_222, %c11_223] : memref<1x8x100xf32, #tpu.memory_space<vmem>>, vector<1x8x78xf32>
    %238 = vector.shape_cast %237 : vector<1x8x78xf32> to vector<8x78xf32>
    %239 = arith.addf %238, %236 : vector<8x78xf32>
    %cst_224 = arith.constant 0.000000e+00 : f32
    %240 = vector.broadcast %cst_224 : f32 to vector<8x78xf32>
    %241 = arith.maximumf %239, %240 : vector<8x78xf32>
    %242 = vector.broadcast %0 : vector<1x78xf32> to vector<8x78xf32>
    %243 = arith.mulf %241, %242 : vector<8x78xf32>
    %c0_225 = arith.constant 0 : index
    %c0_226 = arith.constant 0 : index
    %c11_227 = arith.constant 11 : index
    %244 = vector.load %arg7[%c0_225, %c0_226, %c11_227] : memref<1x8x100xf32, #tpu.memory_space<vmem>>, vector<1x8x78xf32>
    %245 = vector.shape_cast %244 : vector<1x8x78xf32> to vector<8x78xf32>
    %246 = vector.shape_cast %243 : vector<8x78xf32> to vector<1x8x78xf32>
    tpu.vector_store %arg7[%c0_225, %c0_226, %c11_227], %246 {strides = array<i32>} : memref<1x8x100xf32, #tpu.memory_space<vmem>>, vector<1x8x78xf32>,
    %c0_228 = arith.constant 0 : index
    %c0_229 = arith.constant 0 : index
    %c0_230 = arith.constant 0 : index
    %247 = vector.load %arg7[%c0_228, %c0_229, %c0_230] : memref<1x8x100xf32, #tpu.memory_space<vmem>>, vector<1x8x78xf32>
    %248 = vector.shape_cast %247 : vector<1x8x78xf32> to vector<8x78xf32>
    %c2_231 = arith.constant 2 : index
    %c0_232 = arith.constant 0 : index
    %c0_233 = arith.constant 0 : index
    %c0_234 = arith.constant 0 : index
    %249 = vector.load %arg5[%c2_231, %c0_232, %c0_233, %c0_234] : memref<3x9x8x1xf32, #tpu.memory_space<vmem>>, vector<1x1x8x1xf32>
    %250 = vector.shape_cast %249 : vector<1x1x8x1xf32> to vector<8x1xf32>
    %251 = vector.broadcast %250 : vector<8x1xf32> to vector<8x78xf32>
    %252 = arith.mulf %248, %251 : vector<8x78xf32>
    %c0_235 = arith.constant 0 : index
    %c0_236 = arith.constant 0 : index
    %c1_237 = arith.constant 1 : index
    %253 = vector.load %arg7[%c0_235, %c0_236, %c1_237] : memref<1x8x100xf32, #tpu.memory_space<vmem>>, vector<1x8x78xf32>
    %254 = vector.shape_cast %253 : vector<1x8x78xf32> to vector<8x78xf32>
    %c2_238 = arith.constant 2 : index
    %c1_239 = arith.constant 1 : index
    %c0_240 = arith.constant 0 : index
    %c0_241 = arith.constant 0 : index
    %255 = vector.load %arg5[%c2_238, %c1_239, %c0_240, %c0_241] : memref<3x9x8x1xf32, #tpu.memory_space<vmem>>, vector<1x1x8x1xf32>
    %256 = vector.shape_cast %255 : vector<1x1x8x1xf32> to vector<8x1xf32>
    %257 = vector.broadcast %256 : vector<8x1xf32> to vector<8x78xf32>
    %258 = arith.mulf %254, %257 : vector<8x78xf32>
    %259 = arith.addf %252, %258 : vector<8x78xf32>
    %c0_242 = arith.constant 0 : index
    %c0_243 = arith.constant 0 : index
    %c2_244 = arith.constant 2 : index
    %260 = vector.load %arg7[%c0_242, %c0_243, %c2_244] : memref<1x8x100xf32, #tpu.memory_space<vmem>>, vector<1x8x78xf32>
    %261 = vector.shape_cast %260 : vector<1x8x78xf32> to vector<8x78xf32>
    %c2_245 = arith.constant 2 : index
    %c2_246 = arith.constant 2 : index
    %c0_247 = arith.constant 0 : index
    %c0_248 = arith.constant 0 : index
    %262 = vector.load %arg5[%c2_245, %c2_246, %c0_247, %c0_248] : memref<3x9x8x1xf32, #tpu.memory_space<vmem>>, vector<1x1x8x1xf32>
    %263 = vector.shape_cast %262 : vector<1x1x8x1xf32> to vector<8x1xf32>
    %264 = vector.broadcast %263 : vector<8x1xf32> to vector<8x78xf32>
    %265 = arith.mulf %261, %264 : vector<8x78xf32>
    %266 = arith.addf %259, %265 : vector<8x78xf32>
    %c0_249 = arith.constant 0 : index
    %c0_250 = arith.constant 0 : index
    %c10_251 = arith.constant 10 : index
    %267 = vector.load %arg7[%c0_249, %c0_250, %c10_251] : memref<1x8x100xf32, #tpu.memory_space<vmem>>, vector<1x8x78xf32>
    %268 = vector.shape_cast %267 : vector<1x8x78xf32> to vector<8x78xf32>
    %c2_252 = arith.constant 2 : index
    %c3_253 = arith.constant 3 : index
    %c0_254 = arith.constant 0 : index
    %c0_255 = arith.constant 0 : index
    %269 = vector.load %arg5[%c2_252, %c3_253, %c0_254, %c0_255] : memref<3x9x8x1xf32, #tpu.memory_space<vmem>>, vector<1x1x8x1xf32>
    %270 = vector.shape_cast %269 : vector<1x1x8x1xf32> to vector<8x1xf32>
    %271 = vector.broadcast %270 : vector<8x1xf32> to vector<8x78xf32>
    %272 = arith.mulf %268, %271 : vector<8x78xf32>
    %273 = arith.addf %266, %272 : vector<8x78xf32>
    %c0_256 = arith.constant 0 : index
    %c0_257 = arith.constant 0 : index
    %c11_258 = arith.constant 11 : index
    %274 = vector.load %arg7[%c0_256, %c0_257, %c11_258] : memref<1x8x100xf32, #tpu.memory_space<vmem>>, vector<1x8x78xf32>
    %275 = vector.shape_cast %274 : vector<1x8x78xf32> to vector<8x78xf32>
    %c2_259 = arith.constant 2 : index
    %c4_260 = arith.constant 4 : index
    %c0_261 = arith.constant 0 : index
    %c0_262 = arith.constant 0 : index
    %276 = vector.load %arg5[%c2_259, %c4_260, %c0_261, %c0_262] : memref<3x9x8x1xf32, #tpu.memory_space<vmem>>, vector<1x1x8x1xf32>
    %277 = vector.shape_cast %276 : vector<1x1x8x1xf32> to vector<8x1xf32>
    %278 = vector.broadcast %277 : vector<8x1xf32> to vector<8x78xf32>
    %279 = arith.mulf %275, %278 : vector<8x78xf32>
    %280 = arith.addf %273, %279 : vector<8x78xf32>
    %c0_263 = arith.constant 0 : index
    %c0_264 = arith.constant 0 : index
    %c12_265 = arith.constant 12 : index
    %281 = vector.load %arg7[%c0_263, %c0_264, %c12_265] : memref<1x8x100xf32, #tpu.memory_space<vmem>>, vector<1x8x78xf32>
    %282 = vector.shape_cast %281 : vector<1x8x78xf32> to vector<8x78xf32>
    %c2_266 = arith.constant 2 : index
    %c5_267 = arith.constant 5 : index
    %c0_268 = arith.constant 0 : index
    %c0_269 = arith.constant 0 : index
    %283 = vector.load %arg5[%c2_266, %c5_267, %c0_268, %c0_269] : memref<3x9x8x1xf32, #tpu.memory_space<vmem>>, vector<1x1x8x1xf32>
    %284 = vector.shape_cast %283 : vector<1x1x8x1xf32> to vector<8x1xf32>
    %285 = vector.broadcast %284 : vector<8x1xf32> to vector<8x78xf32>
    %286 = arith.mulf %282, %285 : vector<8x78xf32>
    %287 = arith.addf %280, %286 : vector<8x78xf32>
    %c0_270 = arith.constant 0 : index
    %c0_271 = arith.constant 0 : index
    %c20_272 = arith.constant 20 : index
    %288 = vector.load %arg7[%c0_270, %c0_271, %c20_272] : memref<1x8x100xf32, #tpu.memory_space<vmem>>, vector<1x8x78xf32>
    %289 = vector.shape_cast %288 : vector<1x8x78xf32> to vector<8x78xf32>
    %c2_273 = arith.constant 2 : index
    %c6_274 = arith.constant 6 : index
    %c0_275 = arith.constant 0 : index
    %c0_276 = arith.constant 0 : index
    %290 = vector.load %arg5[%c2_273, %c6_274, %c0_275, %c0_276] : memref<3x9x8x1xf32, #tpu.memory_space<vmem>>, vector<1x1x8x1xf32>
    %291 = vector.shape_cast %290 : vector<1x1x8x1xf32> to vector<8x1xf32>
    %292 = vector.broadcast %291 : vector<8x1xf32> to vector<8x78xf32>
    %293 = arith.mulf %289, %292 : vector<8x78xf32>
    %294 = arith.addf %287, %293 : vector<8x78xf32>
    %c0_277 = arith.constant 0 : index
    %c0_278 = arith.constant 0 : index
    %c21_279 = arith.constant 21 : index
    %295 = vector.load %arg7[%c0_277, %c0_278, %c21_279] : memref<1x8x100xf32, #tpu.memory_space<vmem>>, vector<1x8x78xf32>
    %296 = vector.shape_cast %295 : vector<1x8x78xf32> to vector<8x78xf32>
    %c2_280 = arith.constant 2 : index
    %c7_281 = arith.constant 7 : index
    %c0_282 = arith.constant 0 : index
    %c0_283 = arith.constant 0 : index
    %297 = vector.load %arg5[%c2_280, %c7_281, %c0_282, %c0_283] : memref<3x9x8x1xf32, #tpu.memory_space<vmem>>, vector<1x1x8x1xf32>
    %298 = vector.shape_cast %297 : vector<1x1x8x1xf32> to vector<8x1xf32>
    %299 = vector.broadcast %298 : vector<8x1xf32> to vector<8x78xf32>
    %300 = arith.mulf %296, %299 : vector<8x78xf32>
    %301 = arith.addf %294, %300 : vector<8x78xf32>
    %c0_284 = arith.constant 0 : index
    %c0_285 = arith.constant 0 : index
    %c22_286 = arith.constant 22 : index
    %302 = vector.load %arg7[%c0_284, %c0_285, %c22_286] : memref<1x8x100xf32, #tpu.memory_space<vmem>>, vector<1x8x78xf32>
    %303 = vector.shape_cast %302 : vector<1x8x78xf32> to vector<8x78xf32>
    %c2_287 = arith.constant 2 : index
    %c8_288 = arith.constant 8 : index
    %c0_289 = arith.constant 0 : index
    %c0_290 = arith.constant 0 : index
    %304 = vector.load %arg5[%c2_287, %c8_288, %c0_289, %c0_290] : memref<3x9x8x1xf32, #tpu.memory_space<vmem>>, vector<1x1x8x1xf32>
    %305 = vector.shape_cast %304 : vector<1x1x8x1xf32> to vector<8x1xf32>
    %306 = vector.broadcast %305 : vector<8x1xf32> to vector<8x78xf32>
    %307 = arith.mulf %303, %306 : vector<8x78xf32>
    %308 = arith.addf %301, %307 : vector<8x78xf32>
    %c2_291 = arith.constant 2 : index
    %c0_292 = arith.constant 0 : index
    %c0_293 = arith.constant 0 : index
    %309 = vector.load %arg6[%c2_291, %c0_292, %c0_293] : memref<3x8x8xf32, #tpu.memory_space<vmem>>, vector<1x8x8xf32>
    %310 = vector.shape_cast %309 : vector<1x8x8xf32> to vector<8x8xf32>
    %cst_294 = arith.constant dense<0.000000e+00> : vector<8x78xf32>
    %311 = tpu.matmul %310, %308, %cst_294 {dimension_numbers = #tpu.dot_dimension_numbers<[1], [0], [0], [1], [0, 0, 1, 1], [], []>} : vector<8x8xf32>, vector<8x78xf32>, vector<8x78xf32> -> vector<8x78xf32>
    %c0_295 = arith.constant 0 : index
    %c0_296 = arith.constant 0 : index
    %c11_297 = arith.constant 11 : index
    %312 = vector.load %arg7[%c0_295, %c0_296, %c11_297] : memref<1x8x100xf32, #tpu.memory_space<vmem>>, vector<1x8x78xf32>
    %313 = vector.shape_cast %312 : vector<1x8x78xf32> to vector<8x78xf32>
    %314 = arith.addf %313, %311 : vector<8x78xf32>
    %cst_298 = arith.constant 0.000000e+00 : f32
    %315 = vector.broadcast %cst_298 : f32 to vector<8x78xf32>
    %316 = arith.maximumf %314, %315 : vector<8x78xf32>
    %317 = vector.broadcast %0 : vector<1x78xf32> to vector<8x78xf32>
    %318 = arith.mulf %316, %317 : vector<8x78xf32>
    %c0_299 = arith.constant 0 : index
    %c0_300 = arith.constant 0 : index
    %c11_301 = arith.constant 11 : index
    %319 = vector.load %arg7[%c0_299, %c0_300, %c11_301] : memref<1x8x100xf32, #tpu.memory_space<vmem>>, vector<1x8x78xf32>
    %320 = vector.shape_cast %319 : vector<1x8x78xf32> to vector<8x78xf32>
    %321 = vector.shape_cast %318 : vector<8x78xf32> to vector<1x8x78xf32>
    tpu.vector_store %arg7[%c0_299, %c0_300, %c11_301], %321 {strides = array<i32>} : memref<1x8x100xf32, #tpu.memory_space<vmem>>, vector<1x8x78xf32>,
    return
  }
  func.func @transform_0(%arg0: i32) -> (i32, i32, i32, i32) {
    %c0_i32 = arith.constant 0 : i32
    %c0_i32_0 = arith.constant 0 : i32
    %c0_i32_1 = arith.constant 0 : i32
    %c0_i32_2 = arith.constant 0 : i32
    return %arg0, %c0_i32, %c0_i32_0, %c0_i32_1 : i32, i32, i32, i32
  }
  func.func @transform_1(%arg0: i32) -> (i32, i32) {
    %c0_i32 = arith.constant 0 : i32
    %c0_i32_0 = arith.constant 0 : i32
    %c0_i32_1 = arith.constant 0 : i32
    return %c0_i32, %c0_i32_0 : i32, i32
  }
  func.func @transform_2(%arg0: i32) -> (i32, i32, i32) {
    %c0_i32 = arith.constant 0 : i32
    %c0_i32_0 = arith.constant 0 : i32
    %c0_i32_1 = arith.constant 0 : i32
    %c0_i32_2 = arith.constant 0 : i32
    return %c0_i32, %c0_i32_0, %c0_i32_1 : i32, i32, i32
  }
  func.func @transform_3(%arg0: i32) -> (i32, i32) {
    %c0_i32 = arith.constant 0 : i32
    %c0_i32_0 = arith.constant 0 : i32
    %c0_i32_1 = arith.constant 0 : i32
    return %c0_i32, %c0_i32_0 : i32, i32
  }
  func.func @transform_4(%arg0: i32) -> (i32, i32, i32, i32) {
    %c0_i32 = arith.constant 0 : i32
    %c0_i32_0 = arith.constant 0 : i32
    %c0_i32_1 = arith.constant 0 : i32
    %c0_i32_2 = arith.constant 0 : i32
    %c0_i32_3 = arith.constant 0 : i32
    return %c0_i32, %c0_i32_0, %c0_i32_1, %c0_i32_2 : i32, i32, i32, i32
  }
  func.func @transform_5(%arg0: i32) -> (i32, i32, i32) {
    %c0_i32 = arith.constant 0 : i32
    %c0_i32_0 = arith.constant 0 : i32
    %c0_i32_1 = arith.constant 0 : i32
    %c0_i32_2 = arith.constant 0 : i32
    return %c0_i32, %c0_i32_0, %c0_i32_1 : i32, i32, i32
  }
  func.func @transform_6(%arg0: i32) -> (i32, i32, i32) {
    %c0_i32 = arith.constant 0 : i32
    %c0_i32_0 = arith.constant 0 : i32
    %c0_i32_1 = arith.constant 0 : i32
    return %arg0, %c0_i32, %c0_i32_0 : i32, i32, i32
  }
}

</mosaic_0001>

<llo_original>
// kernel: blaze_block.1
$region0: #{blaze_block.1}
  #allocation0 [shape = 'u32[]', space=smem, size = 0x4, offset = 0x4, fixed_abs, tag = 'smem constant byte address 0x4 - core index']
  #allocation1 [shape = 'u32[144,128]{1,0:T(1,128)}', space=vmem, size = 0x12000, scoped, tag = 'internal scratch']
  %s0 = inlined_call_operand.vmem [shape: f32[2,4,4,90], index: 0, kind: input, shape index: {}]
  %s1 = inlined_call_operand.vmem [shape: f32[1,78], index: 1, kind: input, shape index: {}]
  %s2 = inlined_call_operand.vmem [shape: f32[9,4,1], index: 2, kind: input, shape index: {}]
  %s3 = inlined_call_operand.vmem [shape: f32[8,4], index: 3, kind: input, shape index: {}]
  %s4 = inlined_call_operand.vmem [shape: f32[3,9,8,1], index: 4, kind: input, shape index: {}]
  %s5 = inlined_call_operand.vmem [shape: f32[3,8,8], index: 5, kind: input, shape index: {}]
  %s6 = inlined_call_operand.vmem [shape: f32[2,8,100], index: 6, kind: output, shape index: {}]
  %s7 = sld [smem:[#allocation0]]
  $region57: #{blaze_block.1} parent=0
    _
  %s9 = ssub.s32 1, %s7
  %s10 = scalar_select 0, %s9, %s7
  loop: start=0, step=1, limit=4
  $region2: #{blaze_block.1} parent=0 // loop_pre_header
    _
  $region3: #{blaze_block.1} parent=0 // loop_header
    %s12 = sphi 0, %s16
    %p13 = scmp.ge.s32.totalorder %s12, 4
    %s22 = sphi 0, %s24
    %s25 = sphi 0, %s22
    %s26 = sphi 0, %s25
    %s42 = sphi 0, %s26
    %s46 = sphi 0, %s46
    %s48 = sphi 0, %s46
    %s49 = sphi 0, %s48
    %s63 = sphi 0, %s49
    %s67 = sphi 0, %s67
    %s69 = sphi 0, %s67
    %s70 = sphi 0, %s69
    %s84 = sphi 0, %s70
    %s88 = sphi 0, %s88
    %s90 = sphi 0, %s88
    %s91 = sphi 0, %s90
    %s105 = sphi 0, %s91
    %s109 = sphi 0, %s109
    %s111 = sphi 0, %s109
    %s112 = sphi 0, %s111
    %s126 = sphi 0, %s112
    %s130 = sphi 0, %s130
    %s132 = sphi 0, %s130
    %s133 = sphi 0, %s132
    %s147 = sphi 0, %s133
    %s153 = sphi 0, %s155
    %s156 = sphi 0, %s153
    %s157 = sphi 0, %s156
    %s173 = sphi 0, %s157
  $region4: #{blaze_block.1} parent=0 // loop_header_branch
    %15 = sbr.rel (%p13) target = $region8
  $region5: #{blaze_block.1} parent=0 // loop_body
    %s17 = ssub.s32 %s12, 1
    %s18 = ssub.s32 %s12, 2
    %s19 = sadd.s32 %s12, 1
    %s20 = ssub.s32 %s12, %s19
    %p21 = scmp.eq.s32.totalorder %s20, 0
    %s23 = sadd.s32 %s22, 1
    %s24 = scalar_select %p21, %s22, %s23
    %p27 = pneg %p21
    %p28 = scmp.eq.s32.totalorder %s12, 1
    %p29 = por %p27, %p28
    %p30 = scmp.ne.s32.totalorder %s22, %s25
    %p31 = scmp.eq.s32.totalorder %s12, 0
    %p32 = por %p30, %p31
    %p33 = scmp.ne.s32.totalorder %s22, %s25
    %p34 = scmp.eq.s32.totalorder %s17, 1
    %p35 = por %p33, %p34
    %p36 = scmp.ne.s32.totalorder %s25, %s26
    %p37 = scmp.eq.s32.totalorder %s17, 0
    %p38 = por %p36, %p37
    %p39 = scmp.ne.s32.totalorder %s25, %s26
    %p40 = scmp.eq.s32.totalorder %s18, 1
    %p41 = por %p39, %p40
    %p43 = scmp.ne.s32.totalorder %s26, %s42
    %p44 = scmp.eq.s32.totalorder %s18, 0
    %p45 = por %p43, %p44
    %s47 = sadd.s32 %s46, 1
    %p50 = scmp.eq.s32.totalorder %s12, 1
    %p51 = scmp.ne.s32.totalorder %s46, %s48
    %p52 = scmp.eq.s32.totalorder %s12, 0
    %p53 = por %p51, %p52
    %p54 = scmp.ne.s32.totalorder %s46, %s48
    %p55 = scmp.eq.s32.totalorder %s17, 1
    %p56 = por %p54, %p55
    %p57 = scmp.ne.s32.totalorder %s48, %s49
    %p58 = scmp.eq.s32.totalorder %s17, 0
    %p59 = por %p57, %p58
    %p60 = scmp.ne.s32.totalorder %s48, %s49
    %p61 = scmp.eq.s32.totalorder %s18, 1
    %p62 = por %p60, %p61
    %p64 = scmp.ne.s32.totalorder %s49, %s63
    %p65 = scmp.eq.s32.totalorder %s18, 0
    %p66 = por %p64, %p65
    %s68 = sadd.s32 %s67, 1
    %p71 = scmp.eq.s32.totalorder %s12, 1
    %p72 = scmp.ne.s32.totalorder %s67, %s69
    %p73 = scmp.eq.s32.totalorder %s12, 0
    %p74 = por %p72, %p73
    %p75 = scmp.ne.s32.totalorder %s67, %s69
    %p76 = scmp.eq.s32.totalorder %s17, 1
    %p77 = por %p75, %p76
    %p78 = scmp.ne.s32.totalorder %s69, %s70
    %p79 = scmp.eq.s32.totalorder %s17, 0
    %p80 = por %p78, %p79
    %p81 = scmp.ne.s32.totalorder %s69, %s70
    %p82 = scmp.eq.s32.totalorder %s18, 1
    %p83 = por %p81, %p82
    %p85 = scmp.ne.s32.totalorder %s70, %s84
    %p86 = scmp.eq.s32.totalorder %s18, 0
    %p87 = por %p85, %p86
    %s89 = sadd.s32 %s88, 1
    %p92 = scmp.eq.s32.totalorder %s12, 1
    %p93 = scmp.ne.s32.totalorder %s88, %s90
    %p94 = scmp.eq.s32.totalorder %s12, 0
    %p95 = por %p93, %p94
    %p96 = scmp.ne.s32.totalorder %s88, %s90
    %p97 = scmp.eq.s32.totalorder %s17, 1
    %p98 = por %p96, %p97
    %p99 = scmp.ne.s32.totalorder %s90, %s91
    %p100 = scmp.eq.s32.totalorder %s17, 0
    %p101 = por %p99, %p100
    %p102 = scmp.ne.s32.totalorder %s90, %s91
    %p103 = scmp.eq.s32.totalorder %s18, 1
    %p104 = por %p102, %p103
    %p106 = scmp.ne.s32.totalorder %s91, %s105
    %p107 = scmp.eq.s32.totalorder %s18, 0
    %p108 = por %p106, %p107
    %s110 = sadd.s32 %s109, 1
    %p113 = scmp.eq.s32.totalorder %s12, 1
    %p114 = scmp.ne.s32.totalorder %s109, %s111
    %p115 = scmp.eq.s32.totalorder %s12, 0
    %p116 = por %p114, %p115
    %p117 = scmp.ne.s32.totalorder %s109, %s111
    %p118 = scmp.eq.s32.totalorder %s17, 1
    %p119 = por %p117, %p118
    %p120 = scmp.ne.s32.totalorder %s111, %s112
    %p121 = scmp.eq.s32.totalorder %s17, 0
    %p122 = por %p120, %p121
    %p123 = scmp.ne.s32.totalorder %s111, %s112
    %p124 = scmp.eq.s32.totalorder %s18, 1
    %p125 = por %p123, %p124
    %p127 = scmp.ne.s32.totalorder %s112, %s126
    %p128 = scmp.eq.s32.totalorder %s18, 0
    %p129 = por %p127, %p128
    %s131 = sadd.s32 %s130, 1
    %p134 = scmp.eq.s32.totalorder %s12, 1
    %p135 = scmp.ne.s32.totalorder %s130, %s132
    %p136 = scmp.eq.s32.totalorder %s12, 0
    %p137 = por %p135, %p136
    %p138 = scmp.ne.s32.totalorder %s130, %s132
    %p139 = scmp.eq.s32.totalorder %s17, 1
    %p140 = por %p138, %p139
    %p141 = scmp.ne.s32.totalorder %s132, %s133
    %p142 = scmp.eq.s32.totalorder %s17, 0
    %p143 = por %p141, %p142
    %p144 = scmp.ne.s32.totalorder %s132, %s133
    %p145 = scmp.eq.s32.totalorder %s18, 1
    %p146 = por %p144, %p145
    %p148 = scmp.ne.s32.totalorder %s133, %s147
    %p149 = scmp.eq.s32.totalorder %s18, 0
    %p150 = por %p148, %p149
    %s151 = ssub.s32 %s12, %s19
    %p152 = scmp.eq.s32.totalorder %s151, 0
    %s154 = sadd.s32 %s153, 1
    %s155 = scalar_select %p152, %s153, %s154
    %p158 = pneg %p152
    %p159 = scmp.eq.s32.totalorder %s12, 1
    %p160 = por %p158, %p159
    %p161 = scmp.ne.s32.totalorder %s153, %s156
    %p162 = scmp.eq.s32.totalorder %s12, 0
    %p163 = por %p161, %p162
    %p164 = scmp.ne.s32.totalorder %s153, %s156
    %p165 = scmp.eq.s32.totalorder %s17, 1
    %p166 = por %p164, %p165
    %p167 = scmp.ne.s32.totalorder %s156, %s157
    %p168 = scmp.eq.s32.totalorder %s17, 0
    %p169 = por %p167, %p168
    %p170 = scmp.ne.s32.totalorder %s156, %s157
    %p171 = scmp.eq.s32.totalorder %s18, 1
    %p172 = por %p170, %p171
    %p174 = scmp.ne.s32.totalorder %s157, %s173
    %p175 = scmp.eq.s32.totalorder %s18, 0
    %p176 = por %p174, %p175
    %p177 = scmp.le.s32.totalorder 1, %s12
    %p178 = scmp.lt.s32.totalorder %s12, 3
    %p179 = pnand %p177, %p178
    %p180 = pneg %p179
    // Predicated region
    $region9: #{blaze_block.1} parent=5 // pred_check
      _
    $region10: #{blaze_block.1} parent=5 // pred_check_branch
      %182 = sbr.rel (%p179) target = $region12
    $region11: #{blaze_block.1} parent=5 // pred_region
      %s183 = ssub.s32 %s12, 1
      // Predicated region
      $region13: #{blaze_block.1} parent=11 // pred_check
        %p184 = pneg %p59
      $region14: #{blaze_block.1} parent=11 // pred_check_branch
        %186 = sbr.rel (%p184) target = $region16
      $region15: #{blaze_block.1} parent=11 // pred_region
        _
      $region16: #{blaze_block.1} parent=11 // pred_fallthru
        _
      // Predicated region
      $region17: #{blaze_block.1} parent=11 // pred_check
        %p187 = pneg %p80
      $region18: #{blaze_block.1} parent=11 // pred_check_branch
        %189 = sbr.rel (%p187) target = $region20
      $region19: #{blaze_block.1} parent=11 // pred_region
        _
      $region20: #{blaze_block.1} parent=11 // pred_fallthru
        _
      // Predicated region
      $region21: #{blaze_block.1} parent=11 // pred_check
        %p190 = pneg %p101
      $region22: #{blaze_block.1} parent=11 // pred_check_branch
        %192 = sbr.rel (%p190) target = $region24
      $region23: #{blaze_block.1} parent=11 // pred_region
        _
      $region24: #{blaze_block.1} parent=11 // pred_fallthru
        _
      // Predicated region
      $region25: #{blaze_block.1} parent=11 // pred_check
        %p193 = pneg %p122
      $region26: #{blaze_block.1} parent=11 // pred_check_branch
        %195 = sbr.rel (%p193) target = $region28
      $region27: #{blaze_block.1} parent=11 // pred_region
        _
      $region28: #{blaze_block.1} parent=11 // pred_fallthru
        _
      // Predicated region
      $region29: #{blaze_block.1} parent=11 // pred_check
        %p196 = pneg %p143
      $region30: #{blaze_block.1} parent=11 // pred_check_branch
        %198 = sbr.rel (%p196) target = $region32
      $region31: #{blaze_block.1} parent=11 // pred_region
        _
      $region32: #{blaze_block.1} parent=11 // pred_fallthru
        _
    $region12: #{blaze_block.1} parent=5 // pred_fallthru
      _
    %p199 = scmp.lt.s32.totalorder %s12, 2
    // Predicated region
    $region33: #{blaze_block.1} parent=5 // pred_check
      %p200 = pneg %p199
    $region34: #{blaze_block.1} parent=5 // pred_check_branch
      %202 = sbr.rel (%p200) target = $region36
    $region35: #{blaze_block.1} parent=5 // pred_region
      // Predicated region
      $region37: #{blaze_block.1} parent=35 // pred_check
        %p203 = pneg %p32
      $region38: #{blaze_block.1} parent=35 // pred_check_branch
        %205 = sbr.rel (%p203) target = $region40
      $region39: #{blaze_block.1} parent=35 // pred_region
        %p206 = scmp.lt.s32.totalorder %s12, 1
        %s207 = scalar_select %p206, %s12, 1
        %s208 = smul.addr %s207, 4
        %s209 = smul.addr %s208, 4
        %s210 = scalar_lea.vmem %s0, %s209
      $region40: #{blaze_block.1} parent=35 // pred_fallthru
        _
    $region36: #{blaze_block.1} parent=5 // pred_fallthru
      _
    %p211 = scmp.le.s32.totalorder 1, %s12
    %p212 = scmp.lt.s32.totalorder %s12, 3
    %p213 = pnand %p211, %p212
    %p214 = pneg %p213
    // Predicated region
    $region41: #{blaze_block.1} parent=5 // pred_check
      _
    $region42: #{blaze_block.1} parent=5 // pred_check_branch
      %216 = sbr.rel (%p213) target = $region44
    $region43: #{blaze_block.1} parent=5 // pred_region
      %s217 = ssub.s32 %s12, 1
      %p218 = scmp.lt.s32.totalorder %s17, 1
      %s219 = scalar_select %p218, %s17, 1
      %s220 = smul.addr %s219, 4
      %s221 = smul.addr %s220, 4
      %s222 = scalar_lea.vmem %s0, %s221
      %p223 = pneg %p38
      %p224 = pneg %p35
      %p225 = pneg %p59
      %p226 = pneg %p56
      %p227 = pneg %p80
      %p228 = pneg %p77
      %p229 = pneg %p101
      %p230 = pneg %p98
      %p231 = pneg %p122
      %p232 = pneg %p119
      %p233 = pneg %p143
      %p234 = pneg %p140
      %p235 = pneg %p169
      %p236 = pneg %p166
      %p237 = scmp.lt.s32.totalorder %s17, 1
      %s238 = scalar_select %p237, %s17, 1
      %s239 = smul.addr %s238, 8
      %s240 = scalar_lea.vmem %s6, %s239
      %p241 = scmp.lt.s32.totalorder %s17, 1
      %s242 = scalar_select %p241, %s17, 1
      %s243 = smul.addr %s242, 4
      %s244 = smul.addr %s243, 4
      %s245 = scalar_lea.vmem %s0, %s244
      %p246 = scmp.lt.s32.totalorder %s17, 1
      %s247 = scalar_select %p246, %s17, 1
      %s248 = smul.addr %s247, 8
      %s249 = scalar_lea.vmem %s6, %s248
      %v250 = vld [vmem:[%s1] sm:$0x1]
      %vm251 = vcmask 818176
      %252 = vst.msk [vmem:[%s249] sm:$0xff] %vm251, 0.0
      %v253 = vld [vmem:[%s245] sm:$0xf]
      %v254 = vld [vmem:[%s2] sm:$0xf]
      %256 = vset.pattern.permute.xlu0 0
      %257 = vperm.xlu0 %256, %v254
      %v258 = vpop.permute.xlu0 %257
      %v260 = vmul.f32 %v253, %v258
      %s261 = scalar_lea.vmem %s245, 4
      %v262 = vld [vmem:[%s261] sm:$0xf]
      %s263 = scalar_lea.vmem %s2, 4
      %v264 = vld [vmem:[%s263] sm:$0xf]
      %266 = vset.pattern.permute.xlu0 0
      %267 = vperm.xlu0 %266, %v264
      %v268 = vpop.permute.xlu0 %267
      %v270 = vmul.f32 %v262, %v268
      %v271 = vadd.f32 %v260, %v270
      %s272 = scalar_lea.vmem %s2, 8
      %v273 = vld [vmem:[%s272] sm:$0xf]
      %275 = vset.pattern.permute.xlu0 0
      %276 = vperm.xlu0 %275, %v273
      %v277 = vpop.permute.xlu0 %276
      %v279 = vmul.f32 %v253, %v277
      %281 = vrot.lane.b32.xlu0 %v279, 127
      %v282 = vpop.permute.xlu0 %281
      %v284 = vadd.f32 %v271, %v282
      %s285 = scalar_lea.vmem %s245, 8
      %v286 = vld [vmem:[%s285] sm:$0xf]
      %s287 = scalar_lea.vmem %s2, 12
      %v288 = vld [vmem:[%s287] sm:$0xf]
      %290 = vset.pattern.permute.xlu0 0
      %291 = vperm.xlu0 %290, %v288
      %v292 = vpop.permute.xlu0 %291
      %v294 = vmul.f32 %v286, %v292
      %v295 = vadd.f32 %v284, %v294
      %s296 = scalar_lea.vmem %s245, 12
      %v297 = vld [vmem:[%s296] sm:$0xf]
      %s298 = scalar_lea.vmem %s2, 16
      %v299 = vld [vmem:[%s298] sm:$0xf]
      %301 = vset.pattern.permute.xlu0 0
      %302 = vperm.xlu0 %301, %v299
      %v303 = vpop.permute.xlu0 %302
      %v305 = vmul.f32 %v297, %v303
      %v306 = vadd.f32 %v295, %v305
      %s307 = scalar_lea.vmem %s2, 20
      %v308 = vld [vmem:[%s307] sm:$0xf]
      %310 = vset.pattern.permute.xlu0 0
      %311 = vperm.xlu0 %310, %v308
      %v312 = vpop.permute.xlu0 %311
      %v314 = vmul.f32 %v286, %v312
      %316 = vrot.lane.b32.xlu0 %v314, 127
      %v317 = vpop.permute.xlu0 %316
      %v319 = vadd.f32 %v306, %v317
      %s320 = scalar_lea.vmem %s2, 24
      %v321 = vld [vmem:[%s320] sm:$0xf]
      %323 = vset.pattern.permute.xlu0 0
      %324 = vperm.xlu0 %323, %v321
      %v325 = vpop.permute.xlu0 %324
      %v327 = vmul.f32 %v253, %v325
      %329 = vrot.lane.b32.xlu0 %v327, 118
      %v330 = vpop.permute.xlu0 %329
      %v332 = vadd.f32 %v319, %v330
      %s333 = scalar_lea.vmem %s2, 28
      %v334 = vld [vmem:[%s333] sm:$0xf]
      %336 = vset.pattern.permute.xlu0 0
      %337 = vperm.xlu0 %336, %v334
      %v338 = vpop.permute.xlu0 %337
      %v340 = vmul.f32 %v262, %v338
      %342 = vrot.lane.b32.xlu0 %v340, 118
      %v343 = vpop.permute.xlu0 %342
      %v345 = vadd.f32 %v332, %v343
      %s346 = scalar_lea.vmem %s2, 32
      %v347 = vld [vmem:[%s346] sm:$0xf]
      %349 = vset.pattern.permute.xlu0 0
      %350 = vperm.xlu0 %349, %v347
      %v351 = vpop.permute.xlu0 %350
      %v353 = vmul.f32 %v253, %v351
      %355 = vrot.lane.b32.xlu0 %v353, 117
      %v356 = vpop.permute.xlu0 %355
      %v358 = vadd.f32 %v345, %v356
      %v359 = vld [vmem:[%s3] sm:$0xff]
      %vm360 = vcmask 31744
      %v362 = vsel %vm360, %v359, 0
      %vm364 = vcmask 1043456
      %v366 = vsel %vm364, %v358, 0
      %368 = vmatprep.subr.mxu0 0.0
      %369 = vmatpush1.msra.mxu0 %v366
      %370 = vmatprep.subr.mxu0 0.0
      %371 = vmatpush1.msra.mxu0 0.0
      %372 = vmatprep.subr.mxu0 0.0
      %373 = vmatpush1.msra.mxu0 0.0
      %374 = vmatprep.subr.mxu0 0.0
      %375 = vmatpush1.msra.mxu0 0.0
      %376 = vmatprep.subr.mxu0 0.0
      %377 = vmatpush1.msra.mxu0 0.0
      %378 = vmatprep.subr.mxu0 0.0
      %379 = vmatpush1.msra.mxu0 0.0
      %380 = vmatprep.subr.mxu0 0.0
      %381 = vmatpush1.msra.mxu0 0.0
      %382 = vmatprep.subr.mxu0 0.0
      %383 = vmatpush1.msra.mxu0 0.0
      %384 = vmatprep.subr.mxu0 0.0
      %385 = vmatpush1.msra.mxu0 0.0
      %386 = vmatprep.subr.mxu0 0.0
      %387 = vmatpush1.msra.mxu0 0.0
      %388 = vmatprep.subr.mxu0 0.0
      %389 = vmatpush1.msra.mxu0 0.0
      %390 = vmatprep.subr.mxu0 0.0
      %391 = vmatpush1.msra.mxu0 0.0
      %392 = vmatprep.subr.mxu0 0.0
      %393 = vmatpush1.msra.mxu0 0.0
      %394 = vmatprep.subr.mxu0 0.0
      %395 = vmatpush1.msra.mxu0 0.0
      %396 = vmatprep.subr.mxu0 0.0
      %397 = vmatpush1.msra.mxu0 0.0
      %398 = vmatprep.subr.mxu0 0.0
      %399 = vmatpush1.msra.mxu0 0.0
      %400 = vmatprep.subr.mxu0 0.0
      %401 = vmatpush1.msra.mxu0 0.0
      %402 = vmatprep.subr.mxu0 0.0
      %403 = vmatpush1.msra.mxu0 0.0
      %404 = vmatprep.subr.mxu0 0.0
      %405 = vmatpush1.msra.mxu0 0.0
      %406 = vmatprep.subr.mxu0 0.0
      %407 = vmatpush1.msra.mxu0 0.0
      %408 = vmatprep.subr.mxu0 0.0
      %409 = vmatpush1.msra.mxu0 0.0
      %410 = vmatprep.subr.mxu0 0.0
      %411 = vmatpush1.msra.mxu0 0.0
      %412 = vmatprep.subr.mxu0 0.0
      %413 = vmatpush1.msra.mxu0 0.0
      %414 = vmatprep.subr.mxu0 0.0
      %415 = vmatpush1.msra.mxu0 0.0
      %416 = vmatprep.subr.mxu0 0.0
      %417 = vmatpush1.msra.mxu0 0.0
      %418 = vmatprep.subr.mxu0 0.0
      %419 = vmatpush1.msra.mxu0 0.0
      %420 = vmatprep.subr.mxu0 0.0
      %421 = vmatpush1.msra.mxu0 0.0
      %422 = vmatprep.subr.mxu0 0.0
      %423 = vmatpush1.msra.mxu0 0.0
      %424 = vmatprep.subr.mxu0 0.0
      %425 = vmatpush1.msra.mxu0 0.0
      %426 = vmatprep.subr.mxu0 0.0
      %427 = vmatpush1.msra.mxu0 0.0
      %428 = vmatprep.subr.mxu0 0.0
      %429 = vmatpush1.msra.mxu0 0.0
      %430 = vmatprep.subr.mxu0 0.0
      %431 = vmatpush1.msra.mxu0 0.0
      %432 = vmatprep.mubr.f32.mxu0 0.0
      %433 = vmatmul.mubr.f32.gmra.mrb[0].mxu0 %v362
      %v434 = vpop.f32.mrb[0].mxu0
      %v435 = vadd.f32 0.0, %v434
      %v436 = vpop.f32.mrb[0].mxu0
      %437 = vdwg.mxu0
      %439 = vrot.lane.b32.xlu0 %v286, 127
      %v440 = vpop.permute.xlu0 %439
      %v442 = vmax.f32 %v297, %v440
      %444 = vrot.lane.b32.xlu0 %v253, 127
      %v445 = vpop.permute.xlu0 %444
      %v447 = vmax.f32 %v262, %v445
      %449 = vrot.lane.b32.xlu0 %v447, 118
      %v450 = vpop.permute.xlu0 %449
      %v452 = vmax.f32 %v442, %v450
      %v453 = vadd.f32 %v435, %v452
      %v454 = vmax.f32 %v453, 0.0
      %v456 = vlaneseq
      %v457 = vshrl.u32 %v456, 7
      %v458 = vsub.s32 0, %v457
      %v459 = vrot.slane %v250, %v458
      %v461 = vmul.f32 %v454, %v459
      %463 = vrot.lane.b32.xlu0 %v461, 11
      %v464 = vpop.permute.xlu0 %463
      %vm466 = vcmask 724056
      %467 = vst.msk [vmem:[%s249] sm:$0xf] %vm466, %v464
      %v468 = vmax.f32 %v435, 0.0
      %v469 = vmul.f32 %v468, %v459
      %471 = vrot.lane.b32.xlu0 %v469, 11
      %v472 = vpop.permute.xlu0 %471
      %vm474 = vcmask 728156
      %475 = vst.msk [vmem:[%s249] sm:$0xf0] %vm474, %v472
      %v476 = vld [vmem:[%s249] sm:$0xff]
      %v477 = vld [vmem:[%s4] sm:$0xff]
      %479 = vset.pattern.permute.xlu0 0
      %480 = vperm.xlu0 %479, %v477
      %v481 = vpop.permute.xlu0 %480
      %v483 = vmul.f32 %v476, %v481
      %s484 = scalar_lea.vmem %s4, 8
      %v485 = vld [vmem:[%s484] sm:$0xff]
      %487 = vset.pattern.permute.xlu0 0
      %488 = vperm.xlu0 %487, %v485
      %v489 = vpop.permute.xlu0 %488
      %v491 = vmul.f32 %v476, %v489
      %493 = vrot.lane.b32.xlu0 %v491, 127
      %v494 = vpop.permute.xlu0 %493
      %v496 = vadd.f32 %v483, %v494
      %s497 = scalar_lea.vmem %s4, 16
      %v498 = vld [vmem:[%s497] sm:$0xff]
      %500 = vset.pattern.permute.xlu0 0
      %501 = vperm.xlu0 %500, %v498
      %v502 = vpop.permute.xlu0 %501
      %v504 = vmul.f32 %v476, %v502
      %506 = vrot.lane.b32.xlu0 %v504, 126
      %v507 = vpop.permute.xlu0 %506
      %v509 = vadd.f32 %v496, %v507
      %s510 = scalar_lea.vmem %s4, 24
      %v511 = vld [vmem:[%s510] sm:$0xff]
      %513 = vset.pattern.permute.xlu0 0
      %514 = vperm.xlu0 %513, %v511
      %v515 = vpop.permute.xlu0 %514
      %v517 = vmul.f32 %v476, %v515
      %519 = vrot.lane.b32.xlu0 %v517, 118
      %v520 = vpop.permute.xlu0 %519
      %v522 = vadd.f32 %v509, %v520
      %s523 = scalar_lea.vmem %s4, 32
      %v524 = vld [vmem:[%s523] sm:$0xff]
      %526 = vset.pattern.permute.xlu0 0
      %527 = vperm.xlu0 %526, %v524
      %v528 = vpop.permute.xlu0 %527
      %v530 = vmul.f32 %v476, %v528
      %532 = vrot.lane.b32.xlu0 %v530, 117
      %v533 = vpop.permute.xlu0 %532
      %v535 = vadd.f32 %v522, %v533
      %s536 = scalar_lea.vmem %s4, 40
      %v537 = vld [vmem:[%s536] sm:$0xff]
      %539 = vset.pattern.permute.xlu0 0
      %540 = vperm.xlu0 %539, %v537
      %v541 = vpop.permute.xlu0 %540
      %v543 = vmul.f32 %v476, %v541
      %545 = vrot.lane.b32.xlu0 %v543, 116
      %v546 = vpop.permute.xlu0 %545
      %v548 = vadd.f32 %v535, %v546
      %s549 = scalar_lea.vmem %s4, 48
      %v550 = vld [vmem:[%s549] sm:$0xff]
      %552 = vset.pattern.permute.xlu0 0
      %553 = vperm.xlu0 %552, %v550
      %v554 = vpop.permute.xlu0 %553
      %v556 = vmul.f32 %v476, %v554
      %558 = vrot.lane.b32.xlu0 %v556, 108
      %v559 = vpop.permute.xlu0 %558
      %v561 = vadd.f32 %v548, %v559
      %s562 = scalar_lea.vmem %s4, 56
      %v563 = vld [vmem:[%s562] sm:$0xff]
      %565 = vset.pattern.permute.xlu0 0
      %566 = vperm.xlu0 %565, %v563
      %v567 = vpop.permute.xlu0 %566
      %v569 = vmul.f32 %v476, %v567
      %571 = vrot.lane.b32.xlu0 %v569, 107
      %v572 = vpop.permute.xlu0 %571
      %v574 = vadd.f32 %v561, %v572
      %s575 = scalar_lea.vmem %s4, 64
      %v576 = vld [vmem:[%s575] sm:$0xff]
      %578 = vset.pattern.permute.xlu0 0
      %579 = vperm.xlu0 %578, %v576
      %v580 = vpop.permute.xlu0 %579
      %v582 = vmul.f32 %v476, %v580
      %584 = vrot.lane.b32.xlu0 %v582, 106
      %v585 = vpop.permute.xlu0 %584
      %v587 = vadd.f32 %v574, %v585
      %v588 = vld [vmem:[%s5] sm:$0xff]
      %vm589 = vcmask 64512
      %v591 = vsel %vm589, %v588, 0
      %593 = vmatprep.subr.mxu0 0.0
      %594 = vmatpush1.msra.mxu0 %v587
      %595 = vmatprep.subr.mxu0 0.0
      %596 = vmatpush1.msra.mxu0 0.0
      %597 = vmatprep.subr.mxu0 0.0
      %598 = vmatpush1.msra.mxu0 0.0
      %599 = vmatprep.subr.mxu0 0.0
      %600 = vmatpush1.msra.mxu0 0.0
      %601 = vmatprep.subr.mxu0 0.0
      %602 = vmatpush1.msra.mxu0 0.0
      %603 = vmatprep.subr.mxu0 0.0
      %604 = vmatpush1.msra.mxu0 0.0
      %605 = vmatprep.subr.mxu0 0.0
      %606 = vmatpush1.msra.mxu0 0.0
      %607 = vmatprep.subr.mxu0 0.0
      %608 = vmatpush1.msra.mxu0 0.0
      %609 = vmatprep.subr.mxu0 0.0
      %610 = vmatpush1.msra.mxu0 0.0
      %611 = vmatprep.subr.mxu0 0.0
      %612 = vmatpush1.msra.mxu0 0.0
      %613 = vmatprep.subr.mxu0 0.0
      %614 = vmatpush1.msra.mxu0 0.0
      %615 = vmatprep.subr.mxu0 0.0
      %616 = vmatpush1.msra.mxu0 0.0
      %617 = vmatprep.subr.mxu0 0.0
      %618 = vmatpush1.msra.mxu0 0.0
      %619 = vmatprep.subr.mxu0 0.0
      %620 = vmatpush1.msra.mxu0 0.0
      %621 = vmatprep.subr.mxu0 0.0
      %622 = vmatpush1.msra.mxu0 0.0
      %623 = vmatprep.subr.mxu0 0.0
      %624 = vmatpush1.msra.mxu0 0.0
      %625 = vmatprep.subr.mxu0 0.0
      %626 = vmatpush1.msra.mxu0 0.0
      %627 = vmatprep.subr.mxu0 0.0
      %628 = vmatpush1.msra.mxu0 0.0
      %629 = vmatprep.subr.mxu0 0.0
      %630 = vmatpush1.msra.mxu0 0.0
      %631 = vmatprep.subr.mxu0 0.0
      %632 = vmatpush1.msra.mxu0 0.0
      %633 = vmatprep.subr.mxu0 0.0
      %634 = vmatpush1.msra.mxu0 0.0
      %635 = vmatprep.subr.mxu0 0.0
      %636 = vmatpush1.msra.mxu0 0.0
      %637 = vmatprep.subr.mxu0 0.0
      %638 = vmatpush1.msra.mxu0 0.0
      %639 = vmatprep.subr.mxu0 0.0
      %640 = vmatpush1.msra.mxu0 0.0
      %641 = vmatprep.subr.mxu0 0.0
      %642 = vmatpush1.msra.mxu0 0.0
      %643 = vmatprep.subr.mxu0 0.0
      %644 = vmatpush1.msra.mxu0 0.0
      %645 = vmatprep.subr.mxu0 0.0
      %646 = vmatpush1.msra.mxu0 0.0
      %647 = vmatprep.subr.mxu0 0.0
      %648 = vmatpush1.msra.mxu0 0.0
      %649 = vmatprep.subr.mxu0 0.0
      %650 = vmatpush1.msra.mxu0 0.0
      %651 = vmatprep.subr.mxu0 0.0
      %652 = vmatpush1.msra.mxu0 0.0
      %653 = vmatprep.subr.mxu0 0.0
      %654 = vmatpush1.msra.mxu0 0.0
      %655 = vmatprep.subr.mxu0 0.0
      %656 = vmatpush1.msra.mxu0 0.0
      %657 = vmatprep.mubr.f32.mxu0 0.0
      %658 = vmatmul.mubr.f32.gmra.mrb[0].mxu0 %v591
      %v659 = vpop.f32.mrb[0].mxu0
      %v660 = vadd.f32 0.0, %v659
      %v661 = vpop.f32.mrb[0].mxu0
      %662 = vdwg.mxu0
      %664 = vrot.lane.b32.xlu0 %v660, 11
      %v665 = vpop.permute.xlu0 %664
      %v667 = vadd.f32 %v476, %v665
      %v668 = vmax.f32 %v667, 0.0
      %669 = vrot.lane.b32.xlu0 %v459, 11
      %v670 = vpop.permute.xlu0 %669
      %v672 = vmul.f32 %v668, %v670
      %vm673 = vcmask 728152
      %674 = vst.msk [vmem:[%s249] sm:$0xff] %vm673, %v672
      %v675 = vld [vmem:[%s249] sm:$0xff]
      %s676 = scalar_lea.vmem %s4, 72
      %v677 = vld [vmem:[%s676] sm:$0xff]
      %679 = vset.pattern.permute.xlu0 0
      %680 = vperm.xlu0 %679, %v677
      %v681 = vpop.permute.xlu0 %680
      %v683 = vmul.f32 %v675, %v681
      %s684 = scalar_lea.vmem %s4, 80
      %v685 = vld [vmem:[%s684] sm:$0xff]
      %687 = vset.pattern.permute.xlu0 0
      %688 = vperm.xlu0 %687, %v685
      %v689 = vpop.permute.xlu0 %688
      %v691 = vmul.f32 %v675, %v689
      %693 = vrot.lane.b32.xlu0 %v691, 127
      %v694 = vpop.permute.xlu0 %693
      %v696 = vadd.f32 %v683, %v694
      %s697 = scalar_lea.vmem %s4, 88
      %v698 = vld [vmem:[%s697] sm:$0xff]
      %700 = vset.pattern.permute.xlu0 0
      %701 = vperm.xlu0 %700, %v698
      %v702 = vpop.permute.xlu0 %701
      %v704 = vmul.f32 %v675, %v702
      %706 = vrot.lane.b32.xlu0 %v704, 126
      %v707 = vpop.permute.xlu0 %706
      %v709 = vadd.f32 %v696, %v707
      %s710 = scalar_lea.vmem %s4, 96
      %v711 = vld [vmem:[%s710] sm:$0xff]
      %713 = vset.pattern.permute.xlu0 0
      %714 = vperm.xlu0 %713, %v711
      %v715 = vpop.permute.xlu0 %714
      %v717 = vmul.f32 %v675, %v715
      %719 = vrot.lane.b32.xlu0 %v717, 118
      %v720 = vpop.permute.xlu0 %719
      %v722 = vadd.f32 %v709, %v720
      %s723 = scalar_lea.vmem %s4, 104
      %v724 = vld [vmem:[%s723] sm:$0xff]
      %726 = vset.pattern.permute.xlu0 0
      %727 = vperm.xlu0 %726, %v724
      %v728 = vpop.permute.xlu0 %727
      %v730 = vmul.f32 %v675, %v728
      %732 = vrot.lane.b32.xlu0 %v730, 117
      %v733 = vpop.permute.xlu0 %732
      %v735 = vadd.f32 %v722, %v733
      %s736 = scalar_lea.vmem %s4, 112
      %v737 = vld [vmem:[%s736] sm:$0xff]
      %739 = vset.pattern.permute.xlu0 0
      %740 = vperm.xlu0 %739, %v737
      %v741 = vpop.permute.xlu0 %740
      %v743 = vmul.f32 %v675, %v741
      %745 = vrot.lane.b32.xlu0 %v743, 116
      %v746 = vpop.permute.xlu0 %745
      %v748 = vadd.f32 %v735, %v746
      %s749 = scalar_lea.vmem %s4, 120
      %v750 = vld [vmem:[%s749] sm:$0xff]
      %752 = vset.pattern.permute.xlu0 0
      %753 = vperm.xlu0 %752, %v750
      %v754 = vpop.permute.xlu0 %753
      %v756 = vmul.f32 %v675, %v754
      %758 = vrot.lane.b32.xlu0 %v756, 108
      %v759 = vpop.permute.xlu0 %758
      %v761 = vadd.f32 %v748, %v759
      %s762 = scalar_lea.vmem %s4, 128
      %v763 = vld [vmem:[%s762] sm:$0xff]
      %765 = vset.pattern.permute.xlu0 0
      %766 = vperm.xlu0 %765, %v763
      %v767 = vpop.permute.xlu0 %766
      %v769 = vmul.f32 %v675, %v767
      %771 = vrot.lane.b32.xlu0 %v769, 107
      %v772 = vpop.permute.xlu0 %771
      %v774 = vadd.f32 %v761, %v772
      %s775 = scalar_lea.vmem %s4, 136
      %v776 = vld [vmem:[%s775] sm:$0xff]
      %778 = vset.pattern.permute.xlu0 0
      %779 = vperm.xlu0 %778, %v776
      %v780 = vpop.permute.xlu0 %779
      %v782 = vmul.f32 %v675, %v780
      %784 = vrot.lane.b32.xlu0 %v782, 106
      %v785 = vpop.permute.xlu0 %784
      %v787 = vadd.f32 %v774, %v785
      %s788 = scalar_lea.vmem %s5, 8
      %v789 = vld [vmem:[%s788] sm:$0xff]
      %v791 = vsel %vm589, %v789, 0
      %793 = vmatprep.subr.mxu0 0.0
      %794 = vmatpush1.msra.mxu0 %v787
      %795 = vmatprep.subr.mxu0 0.0
      %796 = vmatpush1.msra.mxu0 0.0
      %797 = vmatprep.subr.mxu0 0.0
      %798 = vmatpush1.msra.mxu0 0.0
      %799 = vmatprep.subr.mxu0 0.0
      %800 = vmatpush1.msra.mxu0 0.0
      %801 = vmatprep.subr.mxu0 0.0
      %802 = vmatpush1.msra.mxu0 0.0
      %803 = vmatprep.subr.mxu0 0.0
      %804 = vmatpush1.msra.mxu0 0.0
      %805 = vmatprep.subr.mxu0 0.0
      %806 = vmatpush1.msra.mxu0 0.0
      %807 = vmatprep.subr.mxu0 0.0
      %808 = vmatpush1.msra.mxu0 0.0
      %809 = vmatprep.subr.mxu0 0.0
      %810 = vmatpush1.msra.mxu0 0.0
      %811 = vmatprep.subr.mxu0 0.0
      %812 = vmatpush1.msra.mxu0 0.0
      %813 = vmatprep.subr.mxu0 0.0
      %814 = vmatpush1.msra.mxu0 0.0
      %815 = vmatprep.subr.mxu0 0.0
      %816 = vmatpush1.msra.mxu0 0.0
      %817 = vmatprep.subr.mxu0 0.0
      %818 = vmatpush1.msra.mxu0 0.0
      %819 = vmatprep.subr.mxu0 0.0
      %820 = vmatpush1.msra.mxu0 0.0
      %821 = vmatprep.subr.mxu0 0.0
      %822 = vmatpush1.msra.mxu0 0.0
      %823 = vmatprep.subr.mxu0 0.0
      %824 = vmatpush1.msra.mxu0 0.0
      %825 = vmatprep.subr.mxu0 0.0
      %826 = vmatpush1.msra.mxu0 0.0
      %827 = vmatprep.subr.mxu0 0.0
      %828 = vmatpush1.msra.mxu0 0.0
      %829 = vmatprep.subr.mxu0 0.0
      %830 = vmatpush1.msra.mxu0 0.0
      %831 = vmatprep.subr.mxu0 0.0
      %832 = vmatpush1.msra.mxu0 0.0
      %833 = vmatprep.subr.mxu0 0.0
      %834 = vmatpush1.msra.mxu0 0.0
      %835 = vmatprep.subr.mxu0 0.0
      %836 = vmatpush1.msra.mxu0 0.0
      %837 = vmatprep.subr.mxu0 0.0
      %838 = vmatpush1.msra.mxu0 0.0
      %839 = vmatprep.subr.mxu0 0.0
      %840 = vmatpush1.msra.mxu0 0.0
      %841 = vmatprep.subr.mxu0 0.0
      %842 = vmatpush1.msra.mxu0 0.0
      %843 = vmatprep.subr.mxu0 0.0
      %844 = vmatpush1.msra.mxu0 0.0
      %845 = vmatprep.subr.mxu0 0.0
      %846 = vmatpush1.msra.mxu0 0.0
      %847 = vmatprep.subr.mxu0 0.0
      %848 = vmatpush1.msra.mxu0 0.0
      %849 = vmatprep.subr.mxu0 0.0
      %850 = vmatpush1.msra.mxu0 0.0
      %851 = vmatprep.subr.mxu0 0.0
      %852 = vmatpush1.msra.mxu0 0.0
      %853 = vmatprep.subr.mxu0 0.0
      %854 = vmatpush1.msra.mxu0 0.0
      %855 = vmatprep.subr.mxu0 0.0
      %856 = vmatpush1.msra.mxu0 0.0
      %857 = vmatprep.mubr.f32.mxu0 0.0
      %858 = vmatmul.mubr.f32.gmra.mrb[0].mxu0 %v791
      %v859 = vpop.f32.mrb[0].mxu0
      %v860 = vadd.f32 0.0, %v859
      %v861 = vpop.f32.mrb[0].mxu0
      %862 = vdwg.mxu0
      %864 = vrot.lane.b32.xlu0 %v860, 11
      %v865 = vpop.permute.xlu0 %864
      %v867 = vadd.f32 %v675, %v865
      %v868 = vmax.f32 %v867, 0.0
      %v869 = vmul.f32 %v868, %v670
      %870 = vst.msk [vmem:[%s249] sm:$0xff] %vm673, %v869
      %v871 = vld [vmem:[%s249] sm:$0xff]
      %s872 = scalar_lea.vmem %s4, 144
      %v873 = vld [vmem:[%s872] sm:$0xff]
      %875 = vset.pattern.permute.xlu0 0
      %876 = vperm.xlu0 %875, %v873
      %v877 = vpop.permute.xlu0 %876
      %v879 = vmul.f32 %v871, %v877
      %s880 = scalar_lea.vmem %s4, 152
      %v881 = vld [vmem:[%s880] sm:$0xff]
      %883 = vset.pattern.permute.xlu0 0
      %884 = vperm.xlu0 %883, %v881
      %v885 = vpop.permute.xlu0 %884
      %v887 = vmul.f32 %v871, %v885
      %889 = vrot.lane.b32.xlu0 %v887, 127
      %v890 = vpop.permute.xlu0 %889
      %v892 = vadd.f32 %v879, %v890
      %s893 = scalar_lea.vmem %s4, 160
      %v894 = vld [vmem:[%s893] sm:$0xff]
      %896 = vset.pattern.permute.xlu0 0
      %897 = vperm.xlu0 %896, %v894
      %v898 = vpop.permute.xlu0 %897
      %v900 = vmul.f32 %v871, %v898
      %902 = vrot.lane.b32.xlu0 %v900, 126
      %v903 = vpop.permute.xlu0 %902
      %v905 = vadd.f32 %v892, %v903
      %s906 = scalar_lea.vmem %s4, 168
      %v907 = vld [vmem:[%s906] sm:$0xff]
      %909 = vset.pattern.permute.xlu0 0
      %910 = vperm.xlu0 %909, %v907
      %v911 = vpop.permute.xlu0 %910
      %v913 = vmul.f32 %v871, %v911
      %915 = vrot.lane.b32.xlu0 %v913, 118
      %v916 = vpop.permute.xlu0 %915
      %v918 = vadd.f32 %v905, %v916
      %s919 = scalar_lea.vmem %s4, 176
      %v920 = vld [vmem:[%s919] sm:$0xff]
      %922 = vset.pattern.permute.xlu0 0
      %923 = vperm.xlu0 %922, %v920
      %v924 = vpop.permute.xlu0 %923
      %v926 = vmul.f32 %v871, %v924
      %928 = vrot.lane.b32.xlu0 %v926, 117
      %v929 = vpop.permute.xlu0 %928
      %v931 = vadd.f32 %v918, %v929
      %s932 = scalar_lea.vmem %s4, 184
      %v933 = vld [vmem:[%s932] sm:$0xff]
      %935 = vset.pattern.permute.xlu0 0
      %936 = vperm.xlu0 %935, %v933
      %v937 = vpop.permute.xlu0 %936
      %v939 = vmul.f32 %v871, %v937
      %941 = vrot.lane.b32.xlu0 %v939, 116
      %v942 = vpop.permute.xlu0 %941
      %v944 = vadd.f32 %v931, %v942
      %s945 = scalar_lea.vmem %s4, 192
      %v946 = vld [vmem:[%s945] sm:$0xff]
      %948 = vset.pattern.permute.xlu0 0
      %949 = vperm.xlu0 %948, %v946
      %v950 = vpop.permute.xlu0 %949
      %v952 = vmul.f32 %v871, %v950
      %954 = vrot.lane.b32.xlu0 %v952, 108
      %v955 = vpop.permute.xlu0 %954
      %v957 = vadd.f32 %v944, %v955
      %s958 = scalar_lea.vmem %s4, 200
      %v959 = vld [vmem:[%s958] sm:$0xff]
      %961 = vset.pattern.permute.xlu0 0
      %962 = vperm.xlu0 %961, %v959
      %v963 = vpop.permute.xlu0 %962
      %v965 = vmul.f32 %v871, %v963
      %967 = vrot.lane.b32.xlu0 %v965, 107
      %v968 = vpop.permute.xlu0 %967
      %v970 = vadd.f32 %v957, %v968
      %s971 = scalar_lea.vmem %s4, 208
      %v972 = vld [vmem:[%s971] sm:$0xff]
      %974 = vset.pattern.permute.xlu0 0
      %975 = vperm.xlu0 %974, %v972
      %v976 = vpop.permute.xlu0 %975
      %v978 = vmul.f32 %v871, %v976
      %980 = vrot.lane.b32.xlu0 %v978, 106
      %v981 = vpop.permute.xlu0 %980
      %v983 = vadd.f32 %v970, %v981
      %s984 = scalar_lea.vmem %s5, 16
      %v985 = vld [vmem:[%s984] sm:$0xff]
      %v987 = vsel %vm589, %v985, 0
      %989 = vmatprep.subr.mxu0 0.0
      %990 = vmatpush1.msra.mxu0 %v983
      %991 = vmatprep.subr.mxu0 0.0
      %992 = vmatpush1.msra.mxu0 0.0
      %993 = vmatprep.subr.mxu0 0.0
      %994 = vmatpush1.msra.mxu0 0.0
      %995 = vmatprep.subr.mxu0 0.0
      %996 = vmatpush1.msra.mxu0 0.0
      %997 = vmatprep.subr.mxu0 0.0
      %998 = vmatpush1.msra.mxu0 0.0
      %999 = vmatprep.subr.mxu0 0.0
      %1000 = vmatpush1.msra.mxu0 0.0
      %1001 = vmatprep.subr.mxu0 0.0
      %1002 = vmatpush1.msra.mxu0 0.0
      %1003 = vmatprep.subr.mxu0 0.0
      %1004 = vmatpush1.msra.mxu0 0.0
      %1005 = vmatprep.subr.mxu0 0.0
      %1006 = vmatpush1.msra.mxu0 0.0
      %1007 = vmatprep.subr.mxu0 0.0
      %1008 = vmatpush1.msra.mxu0 0.0
      %1009 = vmatprep.subr.mxu0 0.0
      %1010 = vmatpush1.msra.mxu0 0.0
      %1011 = vmatprep.subr.mxu0 0.0
      %1012 = vmatpush1.msra.mxu0 0.0
      %1013 = vmatprep.subr.mxu0 0.0
      %1014 = vmatpush1.msra.mxu0 0.0
      %1015 = vmatprep.subr.mxu0 0.0
      %1016 = vmatpush1.msra.mxu0 0.0
      %1017 = vmatprep.subr.mxu0 0.0
      %1018 = vmatpush1.msra.mxu0 0.0
      %1019 = vmatprep.subr.mxu0 0.0
      %1020 = vmatpush1.msra.mxu0 0.0
      %1021 = vmatprep.subr.mxu0 0.0
      %1022 = vmatpush1.msra.mxu0 0.0
      %1023 = vmatprep.subr.mxu0 0.0
      %1024 = vmatpush1.msra.mxu0 0.0
      %1025 = vmatprep.subr.mxu0 0.0
      %1026 = vmatpush1.msra.mxu0 0.0
      %1027 = vmatprep.subr.mxu0 0.0
      %1028 = vmatpush1.msra.mxu0 0.0
      %1029 = vmatprep.subr.mxu0 0.0
      %1030 = vmatpush1.msra.mxu0 0.0
      %1031 = vmatprep.subr.mxu0 0.0
      %1032 = vmatpush1.msra.mxu0 0.0
      %1033 = vmatprep.subr.mxu0 0.0
      %1034 = vmatpush1.msra.mxu0 0.0
      %1035 = vmatprep.subr.mxu0 0.0
      %1036 = vmatpush1.msra.mxu0 0.0
      %1037 = vmatprep.subr.mxu0 0.0
      %1038 = vmatpush1.msra.mxu0 0.0
      %1039 = vmatprep.subr.mxu0 0.0
      %1040 = vmatpush1.msra.mxu0 0.0
      %1041 = vmatprep.subr.mxu0 0.0
      %1042 = vmatpush1.msra.mxu0 0.0
      %1043 = vmatprep.subr.mxu0 0.0
      %1044 = vmatpush1.msra.mxu0 0.0
      %1045 = vmatprep.subr.mxu0 0.0
      %1046 = vmatpush1.msra.mxu0 0.0
      %1047 = vmatprep.subr.mxu0 0.0
      %1048 = vmatpush1.msra.mxu0 0.0
      %1049 = vmatprep.subr.mxu0 0.0
      %1050 = vmatpush1.msra.mxu0 0.0
      %1051 = vmatprep.subr.mxu0 0.0
      %1052 = vmatpush1.msra.mxu0 0.0
      %1053 = vmatprep.mubr.f32.mxu0 0.0
      %1054 = vmatmul.mubr.f32.gmra.mrb[0].mxu0 %v987
      %v1055 = vpop.f32.mrb[0].mxu0
      %v1056 = vadd.f32 0.0, %v1055
      %v1057 = vpop.f32.mrb[0].mxu0
      %1058 = vdwg.mxu0
      %1060 = vrot.lane.b32.xlu0 %v1056, 11
      %v1061 = vpop.permute.xlu0 %1060
      %v1063 = vadd.f32 %v871, %v1061
      %v1064 = vmax.f32 %v1063, 0.0
      %v1065 = vmul.f32 %v1064, %v670
      %1066 = vst.msk [vmem:[%s249] sm:$0xff] %vm673, %v1065
      %p1067 = scmp.lt.s32.totalorder %s17, 1
      %s1068 = scalar_select %p1067, %s17, 1
      %s1069 = smul.addr %s1068, 8
      %s1070 = scalar_lea.vmem %s6, %s1069
      // Predicated region
      $region45: #{blaze_block.1} parent=43 // pred_check
        %p1071 = pneg %p166
      $region46: #{blaze_block.1} parent=43 // pred_check_branch
        %1073 = sbr.rel (%p1071) target = $region48
      $region47: #{blaze_block.1} parent=43 // pred_region
        _
      $region48: #{blaze_block.1} parent=43 // pred_fallthru
        _
    $region44: #{blaze_block.1} parent=5 // pred_fallthru
      _
    %p1074 = scmp.le.s32.totalorder 2, %s12
    // Predicated region
    $region49: #{blaze_block.1} parent=5 // pred_check
      %p1075 = pneg %p1074
    $region50: #{blaze_block.1} parent=5 // pred_check_branch
      %1077 = sbr.rel (%p1075) target = $region52
    $region51: #{blaze_block.1} parent=5 // pred_region
      %s1078 = ssub.s32 %s12, 2
      // Predicated region
      $region53: #{blaze_block.1} parent=51 // pred_check
        %p1079 = pneg %p172
      $region54: #{blaze_block.1} parent=51 // pred_check_branch
        %1081 = sbr.rel (%p1079) target = $region56
      $region55: #{blaze_block.1} parent=51 // pred_region
        %p1082 = scmp.lt.s32.totalorder %s18, 1
        %s1083 = scalar_select %p1082, %s18, 1
        %s1084 = smul.addr %s1083, 8
        %s1085 = scalar_lea.vmem %s6, %s1084
      $region56: #{blaze_block.1} parent=51 // pred_fallthru
        _
    $region52: #{blaze_block.1} parent=5 // pred_fallthru
      _
  $region6: #{blaze_block.1} parent=0 // loop_footer
    %s16 = sadd.s32 1, %s12
  $region7: #{blaze_block.1} parent=0 // loop_footer_branch
    %11 = sbr.rel target = $region3
  $region8: #{blaze_block.1} parent=0 // loop_exit
    _

</llo_original>
